<compile_context>
chip_gen: v7x
topology: tpu7x:2x2x1
jax: 0.10.0
libtpu: 0.0.40
codegen_flags: <defaults>
</compile_context>

<pallas_src>
import functools

import jax
import jax.numpy as jnp
from jax import lax
from jax.experimental import pallas as pl
from jax.experimental.pallas import tpu as pltpu


def _encoder_layer_kernel(
    x_ref,                                     # (1, S, D)  full sequence of one batch
    wq_ref, bq_ref, wk_ref, bk_ref, wv_ref, bv_ref,
    g1_ref, be1_ref,
    w1_ref, b1_ref, w2_ref, b2_ref,
    g2_ref, be2_ref,
    out_ref,                                   # (1, Tq, D)
    k_scr, v_scr,                              # (S, D) persistent K / V for this batch
    ctx_scr,                                   # (Tq, D) f32 per-head context staging
    *, num_heads, head_dim, q_tile, eps1, eps2,
):
    t = pl.program_id(1)

    # ---- once per batch element: K / V projections for the whole sequence ------
    @pl.when(t == 0)
    def _():
        x_full = x_ref[0]                                         # [S, D] native dtype
        k = jnp.dot(x_full, wk_ref[...], preferred_element_type=jnp.float32)
        v = jnp.dot(x_full, wv_ref[...], preferred_element_type=jnp.float32)
        k_scr[...] = (k + bk_ref[...].astype(jnp.float32)).astype(k_scr.dtype)
        v_scr[...] = (v + bv_ref[...].astype(jnp.float32)).astype(v_scr.dtype)

    # ---- query tile of this grid step ------------------------------------------
    q_start = pl.multiple_of(t * q_tile, q_tile)
    xq = x_ref[0, pl.ds(q_start, q_tile), :]                      # [Tq, D] native dtype

    q = (jnp.dot(xq, wq_ref[...], preferred_element_type=jnp.float32)
         + bq_ref[...].astype(jnp.float32))                       # [Tq, D] f32 accum
    scale = 1.0 / (float(head_dim) ** 0.5)
    q = (q * scale).astype(k_scr.dtype)                           # fold scale, native dtype

    # ---- per-head scaled dot-product attention ----------------------------------
    # heads written straight into VMEM ctx scratch (no concatenate)
    for h in range(num_heads):
        sl = slice(h * head_dim, (h + 1) * head_dim)
        s = jnp.dot(q[:, sl], k_scr[:, sl].T,
                    preferred_element_type=jnp.float32)           # [Tq, S] f32
        s = s - jnp.max(s, axis=-1, keepdims=True)
        p = jnp.exp(s)
        inv = pl.reciprocal(jnp.sum(p, axis=-1, keepdims=True), approx=True)
        p = (p * inv).astype(v_scr.dtype)                         # probs, native dtype
        # attention-probs dropout: identity at inference
        ctx_scr[:, sl] = jnp.dot(p, v_scr[:, sl],
                                 preferred_element_type=jnp.float32)

    def layer_norm(t32, g_ref, b_ref, eps):
        mu = jnp.mean(t32, axis=-1, keepdims=True)
        c = t32 - mu
        var = jnp.mean(c * c, axis=-1, keepdims=True)
        return (c * lax.rsqrt(var + eps)) * g_ref[...].astype(jnp.float32) \
            + b_ref[...].astype(jnp.float32)

    # ---- residual + LayerNorm1 (hidden dropout = identity) ----------------------
    h1 = layer_norm(xq.astype(jnp.float32) + ctx_scr[...], g1_ref, be1_ref, eps1)

    # ---- position-wise feed-forward (ReLU) --------------------------------------
    f = (jnp.dot(h1.astype(w1_ref.dtype), w1_ref[...],
                 preferred_element_type=jnp.float32)
         + b1_ref[...].astype(jnp.float32))
    f = jnp.maximum(f, 0.0)
    f = (jnp.dot(f.astype(w2_ref.dtype), w2_ref[...],
                 preferred_element_type=jnp.float32)
         + b2_ref[...].astype(jnp.float32))

    # ---- residual + LayerNorm2 ---------------------------------------------------
    out = layer_norm(h1 + f, g2_ref, be2_ref, eps2)
    out_ref[0] = out.astype(out_ref.dtype)


def encoder_layer(x, params, *, num_heads, eps1=1e-5, eps2=1e-6, q_tile=None):
    """x: [batch, seq, model_dim]; returns [batch, seq, model_dim]."""
    (wq, bq, wk, bk, wv, bv,
     g1, be1, w1, b1, w2, b2, g2, be2) = params

    B, S, D = x.shape
    F = w1.shape[1]
    if D % num_heads != 0:
        raise ValueError("model_dim not a multiple of num_attention_heads")
    head_dim = D // num_heads

    if q_tile is None:
        q_tile = next((c for c in (256, 128) if S % c == 0), S)
    if S % q_tile != 0:
        raise ValueError("seq_len must be a multiple of q_tile")
    n_q = S // q_tile

    row = lambda v: v.reshape(1, -1)          # 2-D (1, N): lane-dense vector layout

    kernel = functools.partial(
        _encoder_layer_kernel,
        num_heads=num_heads, head_dim=head_dim, q_tile=q_tile,
        eps1=eps1, eps2=eps2)

    def resident(shape):
        # whole-array block, constant index -> DMA'd once, stays VMEM-resident
        zeros = (0,) * len(shape)
        return pl.BlockSpec(shape, lambda b, t: zeros)

    flops = 2 * B * S * D * (3 * D + 2 * F) + 4 * B * num_heads * S * S * head_dim
    bytes_accessed = (2 * B * S * D + 3 * D * D + 2 * D * F
                      + 8 * D + F) * x.dtype.itemsize
    cost = pl.CostEstimate(flops=int(flops),
                           transcendentals=int(B * num_heads * S * S),
                           bytes_accessed=int(bytes_accessed))

    return pl.pallas_call(
        kernel,
        out_shape=jax.ShapeDtypeStruct((B, S, D), x.dtype),
        grid=(B, n_q),
        in_specs=[
            pl.BlockSpec((1, S, D), lambda b, t: (b, 0, 0)),    # x: re-DMA'd per batch only
            resident((D, D)), resident((1, D)),                 # Wq, bq
            resident((D, D)), resident((1, D)),                 # Wk, bk
            resident((D, D)), resident((1, D)),                 # Wv, bv
            resident((1, D)), resident((1, D)),                 # LN1 gamma, beta
            resident((D, F)), resident((1, F)),                 # W1, b1
            resident((F, D)), resident((1, D)),                 # W2, b2
            resident((1, D)), resident((1, D)),                 # LN2 gamma, beta
        ],
        out_specs=pl.BlockSpec((1, q_tile, D), lambda b, t: (b, t, 0)),
        scratch_shapes=[
            pltpu.VMEM((S, D), x.dtype),            # K (whole sequence, per batch)
            pltpu.VMEM((S, D), x.dtype),            # V
            pltpu.VMEM((q_tile, D), jnp.float32),   # per-head context staging
        ],
        compiler_params=pltpu.CompilerParams(
            dimension_semantics=("parallel", "arbitrary"),
            vmem_limit_bytes=48 * 1024 * 1024),     # > 16/32 MiB scoped defaults, < v7x 64 MiB
        cost_estimate=cost,
    )(x, wq, row(bq), wk, row(bk), wv, row(bv),
      row(g1), row(be1), w1, row(b1), w2, row(b2), row(g2), row(be2))


def _reference(x, params, *, num_heads, eps1=1e-5, eps2=1e-6):
    (wq, bq, wk, bk, wv, bv,
     g1, be1, w1, b1, w2, b2, g2, be2) = params
    B, S, D = x.shape
    hd = D // num_heads

    def split_heads(t):
        return t.reshape(B, S, num_heads, hd).transpose(0, 2, 1, 3)

    q = split_heads(x @ wq + bq)
    k = split_heads(x @ wk + bk)
    v = split_heads(x @ wv + bv)
    scores = jnp.einsum("bhqd,bhkd->bhqk", q, k) / (hd ** 0.5)
    probs = jax.nn.softmax(scores, axis=-1)
    ctx = jnp.einsum("bhqk,bhkd->bhqd", probs, v)
    ctx = ctx.transpose(0, 2, 1, 3).reshape(B, S, D)

    def ln(t, g, b, eps):
        mu = t.mean(-1, keepdims=True)
        var = ((t - mu) ** 2).mean(-1, keepdims=True)
        return (t - mu) / jnp.sqrt(var + eps) * g + b

    h = ln(x + ctx, g1, be1, eps1)
    f = jnp.maximum(h @ w1 + b1, 0.0)
    f = f @ w2 + b2
    return ln(h + f, g2, be2, eps2)


if __name__ == "__main__":
    # small config: model_dim=32, heads=4 (head_dim=8), ffn_dim=64, batch=2, seq=8
    B, S, D, H, F = 2, 8, 32, 4, 64
    layer_norm_eps = 1e-6

    key = jax.random.PRNGKey(0)
    ks = jax.random.split(key, 16)
    nrm = lambda k, shape, s=0.1: (s * jax.random.normal(k, shape)).astype(jnp.float32)

    x = jax.random.normal(ks[0], (B, S, D), dtype=jnp.float32)

    params = (
        nrm(ks[1], (D, D)),  nrm(ks[2], (D,)),       # Wq, bq   (stored as [in, out])
        nrm(ks[3], (D, D)),  nrm(ks[4], (D,)),       # Wk, bk
        nrm(ks[5], (D, D)),  nrm(ks[6], (D,)),       # Wv, bv
        1.0 + nrm(ks[7], (D,)), nrm(ks[8], (D,)),    # LN1 gamma, beta
        nrm(ks[9], (D, F)),  nrm(ks[10], (F,)),      # W1, b1
        nrm(ks[11], (F, D)), nrm(ks[12], (D,)),      # W2, b2
        1.0 + nrm(ks[13], (D,)), nrm(ks[14], (D,)),  # LN2 gamma, beta
    )

    out = encoder_layer(x, params, num_heads=H, eps1=1e-5, eps2=layer_norm_eps)
    out = jax.block_until_ready(out)

    ref = _reference(x, params, num_heads=H, eps1=1e-5, eps2=layer_norm_eps)
    assert out.shape == (B, S, D), out.shape
    assert jnp.allclose(out, ref, atol=1e-2, rtol=1e-2), (
        "mismatch vs reference, max abs err = %g" % float(jnp.max(jnp.abs(out - ref))))

    print("KERNEL_OK")
</pallas_src>

<mosaic_0001>
module attributes {stable_mosaic.version = 11 : i64} {
  func.func @_encoder_layer_kernel(%arg0: i32, %arg1: i32, %arg2: memref<1x8x32xf32, #tpu.memory_space<vmem>>, %arg3: memref<32x32xf32, #tpu.memory_space<vmem>>, %arg4: memref<1x32xf32, #tpu.memory_space<vmem>>, %arg5: memref<32x32xf32, #tpu.memory_space<vmem>>, %arg6: memref<1x32xf32, #tpu.memory_space<vmem>>, %arg7: memref<32x32xf32, #tpu.memory_space<vmem>>, %arg8: memref<1x32xf32, #tpu.memory_space<vmem>>, %arg9: memref<1x32xf32, #tpu.memory_space<vmem>>, %arg10: memref<1x32xf32, #tpu.memory_space<vmem>>, %arg11: memref<32x64xf32, #tpu.memory_space<vmem>>, %arg12: memref<1x64xf32, #tpu.memory_space<vmem>>, %arg13: memref<64x32xf32, #tpu.memory_space<vmem>>, %arg14: memref<1x32xf32, #tpu.memory_space<vmem>>, %arg15: memref<1x32xf32, #tpu.memory_space<vmem>>, %arg16: memref<1x32xf32, #tpu.memory_space<vmem>>, %arg17: memref<1x8x32xf32, #tpu.memory_space<vmem>>, %arg18: memref<8x32xf32, #tpu.memory_space<vmem>>, %arg19: memref<8x32xf32, #tpu.memory_space<vmem>>, %arg20: memref<8x32xf32, #tpu.memory_space<vmem>>) attributes {dimension_semantics = [#tpu.dimension_semantics<parallel>, #tpu.dimension_semantics<arbitrary>], iteration_bounds = array<i64: 2, 1>, scalar_prefetch = 0 : i64, scratch_operands = 3 : i64, tpu.core_type = #tpu.core_type<tc>, window_params = [{transform_indices = @transform_0, window_bounds = array<i64: 1, 8, 32>}, {pipeline_mode = #tpu.pipeline_mode<synchronous>, transform_indices = @transform_1, window_bounds = array<i64: 32, 32>}, {pipeline_mode = #tpu.pipeline_mode<synchronous>, transform_indices = @transform_2, window_bounds = array<i64: 1, 32>}, {pipeline_mode = #tpu.pipeline_mode<synchronous>, transform_indices = @transform_3, window_bounds = array<i64: 32, 32>}, {pipeline_mode = #tpu.pipeline_mode<synchronous>, transform_indices = @transform_4, window_bounds = array<i64: 1, 32>}, {pipeline_mode = #tpu.pipeline_mode<synchronous>, transform_indices = @transform_5, window_bounds = array<i64: 32, 32>}, {pipeline_mode = #tpu.pipeline_mode<synchronous>, transform_indices = @transform_6, window_bounds = array<i64: 1, 32>}, {pipeline_mode = #tpu.pipeline_mode<synchronous>, transform_indices = @transform_7, window_bounds = array<i64: 1, 32>}, {pipeline_mode = #tpu.pipeline_mode<synchronous>, transform_indices = @transform_8, window_bounds = array<i64: 1, 32>}, {pipeline_mode = #tpu.pipeline_mode<synchronous>, transform_indices = @transform_9, window_bounds = array<i64: 32, 64>}, {pipeline_mode = #tpu.pipeline_mode<synchronous>, transform_indices = @transform_10, window_bounds = array<i64: 1, 64>}, {pipeline_mode = #tpu.pipeline_mode<synchronous>, transform_indices = @transform_11, window_bounds = array<i64: 64, 32>}, {pipeline_mode = #tpu.pipeline_mode<synchronous>, transform_indices = @transform_12, window_bounds = array<i64: 1, 32>}, {pipeline_mode = #tpu.pipeline_mode<synchronous>, transform_indices = @transform_13, window_bounds = array<i64: 1, 32>}, {pipeline_mode = #tpu.pipeline_mode<synchronous>, transform_indices = @transform_14, window_bounds = array<i64: 1, 32>}, {transform_indices = @transform_15, window_bounds = array<i64: 1, 8, 32>}]} {
    %c0_i32 = arith.constant 0 : i32
    %0 = arith.cmpi eq, %arg1, %c0_i32 : i32
    %1 = arith.extui %0 : i1 to i32
    %c0_i32_0 = arith.constant 0 : i32
    %2 = arith.cmpi ne, %1, %c0_i32_0 : i32
    scf.if %2 {
      %c0_78 = arith.constant 0 : index
      %c0_79 = arith.constant 0 : index
      %c0_80 = arith.constant 0 : index
      %145 = vector.load %arg2[%c0_78, %c0_79, %c0_80] : memref<1x8x32xf32, #tpu.memory_space<vmem>>, vector<1x8x32xf32>
      %146 = vector.shape_cast %145 : vector<1x8x32xf32> to vector<8x32xf32>
      %c0_81 = arith.constant 0 : index
      %c0_82 = arith.constant 0 : index
      %147 = vector.load %arg5[%c0_81, %c0_82] : memref<32x32xf32, #tpu.memory_space<vmem>>, vector<32x32xf32>
      %cst_83 = arith.constant dense<0.000000e+00> : vector<8x32xf32>
      %148 = tpu.matmul %146, %147, %cst_83 {dimension_numbers = #tpu.dot_dimension_numbers<[1], [0], [0], [1], [0, 0, 1, 1], [], []>} : vector<8x32xf32>, vector<32x32xf32>, vector<8x32xf32> -> vector<8x32xf32>
      %c0_84 = arith.constant 0 : index
      %c0_85 = arith.constant 0 : index
      %149 = vector.load %arg7[%c0_84, %c0_85] : memref<32x32xf32, #tpu.memory_space<vmem>>, vector<32x32xf32>
      %cst_86 = arith.constant dense<0.000000e+00> : vector<8x32xf32>
      %150 = tpu.matmul %146, %149, %cst_86 {dimension_numbers = #tpu.dot_dimension_numbers<[1], [0], [0], [1], [0, 0, 1, 1], [], []>} : vector<8x32xf32>, vector<32x32xf32>, vector<8x32xf32> -> vector<8x32xf32>
      %c0_87 = arith.constant 0 : index
      %c0_88 = arith.constant 0 : index
      %151 = vector.load %arg6[%c0_87, %c0_88] : memref<1x32xf32, #tpu.memory_space<vmem>>, vector<1x32xf32>
      %152 = vector.broadcast %151 : vector<1x32xf32> to vector<8x32xf32>
      %153 = arith.addf %148, %152 : vector<8x32xf32>
      %c0_89 = arith.constant 0 : index
      %c0_90 = arith.constant 0 : index
      %154 = vector.load %arg18[%c0_89, %c0_90] : memref<8x32xf32, #tpu.memory_space<vmem>>, vector<8x32xf32>
      tpu.vector_store %arg18[%c0_89, %c0_90], %153 {strides = array<i32>} : memref<8x32xf32, #tpu.memory_space<vmem>>, vector<8x32xf32>,
      %c0_91 = arith.constant 0 : index
      %c0_92 = arith.constant 0 : index
      %155 = vector.load %arg8[%c0_91, %c0_92] : memref<1x32xf32, #tpu.memory_space<vmem>>, vector<1x32xf32>
      %156 = vector.broadcast %155 : vector<1x32xf32> to vector<8x32xf32>
      %157 = arith.addf %150, %156 : vector<8x32xf32>
      %c0_93 = arith.constant 0 : index
      %c0_94 = arith.constant 0 : index
      %158 = vector.load %arg19[%c0_93, %c0_94] : memref<8x32xf32, #tpu.memory_space<vmem>>, vector<8x32xf32>
      tpu.vector_store %arg19[%c0_93, %c0_94], %157 {strides = array<i32>} : memref<8x32xf32, #tpu.memory_space<vmem>>, vector<8x32xf32>,
    } else {
    }
    %c8_i32 = arith.constant 8 : i32
    %3 = arith.muli %arg1, %c8_i32 : i32
    %4 = tpu.assume_multiple %3, 8 : i32
    %c0 = arith.constant 0 : index
    %5 = arith.index_cast %4 : i32 to index
    %c0_1 = arith.constant 0 : index
    %6 = vector.load %arg2[%c0, %5, %c0_1] : memref<1x8x32xf32, #tpu.memory_space<vmem>>, vector<1x8x32xf32>
    %7 = vector.shape_cast %6 : vector<1x8x32xf32> to vector<8x32xf32>
    %c0_2 = arith.constant 0 : index
    %c0_3 = arith.constant 0 : index
    %8 = vector.load %arg3[%c0_2, %c0_3] : memref<32x32xf32, #tpu.memory_space<vmem>>, vector<32x32xf32>
    %cst = arith.constant dense<0.000000e+00> : vector<8x32xf32>
    %9 = tpu.matmul %7, %8, %cst {dimension_numbers = #tpu.dot_dimension_numbers<[1], [0], [0], [1], [0, 0, 1, 1], [], []>} : vector<8x32xf32>, vector<32x32xf32>, vector<8x32xf32> -> vector<8x32xf32>
    %c0_4 = arith.constant 0 : index
    %c0_5 = arith.constant 0 : index
    %10 = vector.load %arg4[%c0_4, %c0_5] : memref<1x32xf32, #tpu.memory_space<vmem>>, vector<1x32xf32>
    %11 = vector.broadcast %10 : vector<1x32xf32> to vector<8x32xf32>
    %12 = arith.addf %9, %11 : vector<8x32xf32>
    %cst_6 = arith.constant 0.353553385 : f32
    %13 = vector.broadcast %cst_6 : f32 to vector<8x32xf32>
    %14 = arith.mulf %12, %13 : vector<8x32xf32>
    %15 = vector.extract_strided_slice %14 {offsets = [0, 0], sizes = [8, 8], strides = [1, 1]} : vector<8x32xf32> to vector<8x8xf32>
    %c0_7 = arith.constant 0 : index
    %c0_8 = arith.constant 0 : index
    %16 = vector.load %arg18[%c0_7, %c0_8] : memref<8x32xf32, #tpu.memory_space<vmem>>, vector<8x8xf32>
    %17 = tpu.transpose %16, [1, 0] : vector<8x8xf32> -> vector<8x8xf32>
    %cst_9 = arith.constant dense<0.000000e+00> : vector<8x8xf32>
    %18 = tpu.matmul %15, %17, %cst_9 {dimension_numbers = #tpu.dot_dimension_numbers<[1], [0], [0], [1], [0, 0, 1, 1], [], []>} : vector<8x8xf32>, vector<8x8xf32>, vector<8x8xf32> -> vector<8x8xf32>
    %cst_10 = arith.constant dense<0xFF800000> : vector<8xf32>
    %19 = vector.multi_reduction <maximumf>, %18, %cst_10 [1] : vector<8x8xf32> to vector<8xf32>
    %20 = vector.shape_cast %19 : vector<8xf32> to vector<8x1xf32>
    %21 = vector.broadcast %20 : vector<8x1xf32> to vector<8x8xf32>
    %22 = arith.subf %18, %21 : vector<8x8xf32>
    %23 = math.exp %22 : vector<8x8xf32>
    %cst_11 = arith.constant dense<0.000000e+00> : vector<8xf32>
    %24 = vector.multi_reduction <add>, %23, %cst_11 [1] : vector<8x8xf32> to vector<8xf32>
    %25 = vector.shape_cast %24 : vector<8xf32> to vector<8x1xf32>
    %26 = tpu.reciprocal %25 {approx = true} : vector<8x1xf32> -> vector<8x1xf32>
    %27 = vector.broadcast %26 : vector<8x1xf32> to vector<8x8xf32>
    %28 = arith.mulf %23, %27 : vector<8x8xf32>
    %c0_12 = arith.constant 0 : index
    %c0_13 = arith.constant 0 : index
    %29 = vector.load %arg19[%c0_12, %c0_13] : memref<8x32xf32, #tpu.memory_space<vmem>>, vector<8x8xf32>
    %cst_14 = arith.constant dense<0.000000e+00> : vector<8x8xf32>
    %30 = tpu.matmul %28, %29, %cst_14 {dimension_numbers = #tpu.dot_dimension_numbers<[1], [0], [0], [1], [0, 0, 1, 1], [], []>} : vector<8x8xf32>, vector<8x8xf32>, vector<8x8xf32> -> vector<8x8xf32>
    %c0_15 = arith.constant 0 : index
    %c0_16 = arith.constant 0 : index
    %31 = vector.load %arg20[%c0_15, %c0_16] : memref<8x32xf32, #tpu.memory_space<vmem>>, vector<8x8xf32>
    tpu.vector_store %arg20[%c0_15, %c0_16], %30 {strides = array<i32>} : memref<8x32xf32, #tpu.memory_space<vmem>>, vector<8x8xf32>,
    %32 = vector.extract_strided_slice %14 {offsets = [0, 8], sizes = [8, 8], strides = [1, 1]} : vector<8x32xf32> to vector<8x8xf32>
    %c0_17 = arith.constant 0 : index
    %c8 = arith.constant 8 : index
    %33 = vector.load %arg18[%c0_17, %c8] : memref<8x32xf32, #tpu.memory_space<vmem>>, vector<8x8xf32>
    %34 = tpu.transpose %33, [1, 0] : vector<8x8xf32> -> vector<8x8xf32>
    %cst_18 = arith.constant dense<0.000000e+00> : vector<8x8xf32>
    %35 = tpu.matmul %32, %34, %cst_18 {dimension_numbers = #tpu.dot_dimension_numbers<[1], [0], [0], [1], [0, 0, 1, 1], [], []>} : vector<8x8xf32>, vector<8x8xf32>, vector<8x8xf32> -> vector<8x8xf32>
    %cst_19 = arith.constant dense<0xFF800000> : vector<8xf32>
    %36 = vector.multi_reduction <maximumf>, %35, %cst_19 [1] : vector<8x8xf32> to vector<8xf32>
    %37 = vector.shape_cast %36 : vector<8xf32> to vector<8x1xf32>
    %38 = vector.broadcast %37 : vector<8x1xf32> to vector<8x8xf32>
    %39 = arith.subf %35, %38 : vector<8x8xf32>
    %40 = math.exp %39 : vector<8x8xf32>
    %cst_20 = arith.constant dense<0.000000e+00> : vector<8xf32>
    %41 = vector.multi_reduction <add>, %40, %cst_20 [1] : vector<8x8xf32> to vector<8xf32>
    %42 = vector.shape_cast %41 : vector<8xf32> to vector<8x1xf32>
    %43 = tpu.reciprocal %42 {approx = true} : vector<8x1xf32> -> vector<8x1xf32>
    %44 = vector.broadcast %43 : vector<8x1xf32> to vector<8x8xf32>
    %45 = arith.mulf %40, %44 : vector<8x8xf32>
    %c0_21 = arith.constant 0 : index
    %c8_22 = arith.constant 8 : index
    %46 = vector.load %arg19[%c0_21, %c8_22] : memref<8x32xf32, #tpu.memory_space<vmem>>, vector<8x8xf32>
    %cst_23 = arith.constant dense<0.000000e+00> : vector<8x8xf32>
    %47 = tpu.matmul %45, %46, %cst_23 {dimension_numbers = #tpu.dot_dimension_numbers<[1], [0], [0], [1], [0, 0, 1, 1], [], []>} : vector<8x8xf32>, vector<8x8xf32>, vector<8x8xf32> -> vector<8x8xf32>
    %c0_24 = arith.constant 0 : index
    %c8_25 = arith.constant 8 : index
    %48 = vector.load %arg20[%c0_24, %c8_25] : memref<8x32xf32, #tpu.memory_space<vmem>>, vector<8x8xf32>
    tpu.vector_store %arg20[%c0_24, %c8_25], %47 {strides = array<i32>} : memref<8x32xf32, #tpu.memory_space<vmem>>, vector<8x8xf32>,
    %49 = vector.extract_strided_slice %14 {offsets = [0, 16], sizes = [8, 8], strides = [1, 1]} : vector<8x32xf32> to vector<8x8xf32>
    %c0_26 = arith.constant 0 : index
    %c16 = arith.constant 16 : index
    %50 = vector.load %arg18[%c0_26, %c16] : memref<8x32xf32, #tpu.memory_space<vmem>>, vector<8x8xf32>
    %51 = tpu.transpose %50, [1, 0] : vector<8x8xf32> -> vector<8x8xf32>
    %cst_27 = arith.constant dense<0.000000e+00> : vector<8x8xf32>
    %52 = tpu.matmul %49, %51, %cst_27 {dimension_numbers = #tpu.dot_dimension_numbers<[1], [0], [0], [1], [0, 0, 1, 1], [], []>} : vector<8x8xf32>, vector<8x8xf32>, vector<8x8xf32> -> vector<8x8xf32>
    %cst_28 = arith.constant dense<0xFF800000> : vector<8xf32>
    %53 = vector.multi_reduction <maximumf>, %52, %cst_28 [1] : vector<8x8xf32> to vector<8xf32>
    %54 = vector.shape_cast %53 : vector<8xf32> to vector<8x1xf32>
    %55 = vector.broadcast %54 : vector<8x1xf32> to vector<8x8xf32>
    %56 = arith.subf %52, %55 : vector<8x8xf32>
    %57 = math.exp %56 : vector<8x8xf32>
    %cst_29 = arith.constant dense<0.000000e+00> : vector<8xf32>
    %58 = vector.multi_reduction <add>, %57, %cst_29 [1] : vector<8x8xf32> to vector<8xf32>
    %59 = vector.shape_cast %58 : vector<8xf32> to vector<8x1xf32>
    %60 = tpu.reciprocal %59 {approx = true} : vector<8x1xf32> -> vector<8x1xf32>
    %61 = vector.broadcast %60 : vector<8x1xf32> to vector<8x8xf32>
    %62 = arith.mulf %57, %61 : vector<8x8xf32>
    %c0_30 = arith.constant 0 : index
    %c16_31 = arith.constant 16 : index
    %63 = vector.load %arg19[%c0_30, %c16_31] : memref<8x32xf32, #tpu.memory_space<vmem>>, vector<8x8xf32>
    %cst_32 = arith.constant dense<0.000000e+00> : vector<8x8xf32>
    %64 = tpu.matmul %62, %63, %cst_32 {dimension_numbers = #tpu.dot_dimension_numbers<[1], [0], [0], [1], [0, 0, 1, 1], [], []>} : vector<8x8xf32>, vector<8x8xf32>, vector<8x8xf32> -> vector<8x8xf32>
    %c0_33 = arith.constant 0 : index
    %c16_34 = arith.constant 16 : index
    %65 = vector.load %arg20[%c0_33, %c16_34] : memref<8x32xf32, #tpu.memory_space<vmem>>, vector<8x8xf32>
    tpu.vector_store %arg20[%c0_33, %c16_34], %64 {strides = array<i32>} : memref<8x32xf32, #tpu.memory_space<vmem>>, vector<8x8xf32>,
    %66 = vector.extract_strided_slice %14 {offsets = [0, 24], sizes = [8, 8], strides = [1, 1]} : vector<8x32xf32> to vector<8x8xf32>
    %c0_35 = arith.constant 0 : index
    %c24 = arith.constant 24 : index
    %67 = vector.load %arg18[%c0_35, %c24] : memref<8x32xf32, #tpu.memory_space<vmem>>, vector<8x8xf32>
    %68 = tpu.transpose %67, [1, 0] : vector<8x8xf32> -> vector<8x8xf32>
    %cst_36 = arith.constant dense<0.000000e+00> : vector<8x8xf32>
    %69 = tpu.matmul %66, %68, %cst_36 {dimension_numbers = #tpu.dot_dimension_numbers<[1], [0], [0], [1], [0, 0, 1, 1], [], []>} : vector<8x8xf32>, vector<8x8xf32>, vector<8x8xf32> -> vector<8x8xf32>
    %cst_37 = arith.constant dense<0xFF800000> : vector<8xf32>
    %70 = vector.multi_reduction <maximumf>, %69, %cst_37 [1] : vector<8x8xf32> to vector<8xf32>
    %71 = vector.shape_cast %70 : vector<8xf32> to vector<8x1xf32>
    %72 = vector.broadcast %71 : vector<8x1xf32> to vector<8x8xf32>
    %73 = arith.subf %69, %72 : vector<8x8xf32>
    %74 = math.exp %73 : vector<8x8xf32>
    %cst_38 = arith.constant dense<0.000000e+00> : vector<8xf32>
    %75 = vector.multi_reduction <add>, %74, %cst_38 [1] : vector<8x8xf32> to vector<8xf32>
    %76 = vector.shape_cast %75 : vector<8xf32> to vector<8x1xf32>
    %77 = tpu.reciprocal %76 {approx = true} : vector<8x1xf32> -> vector<8x1xf32>
    %78 = vector.broadcast %77 : vector<8x1xf32> to vector<8x8xf32>
    %79 = arith.mulf %74, %78 : vector<8x8xf32>
    %c0_39 = arith.constant 0 : index
    %c24_40 = arith.constant 24 : index
    %80 = vector.load %arg19[%c0_39, %c24_40] : memref<8x32xf32, #tpu.memory_space<vmem>>, vector<8x8xf32>
    %cst_41 = arith.constant dense<0.000000e+00> : vector<8x8xf32>
    %81 = tpu.matmul %79, %80, %cst_41 {dimension_numbers = #tpu.dot_dimension_numbers<[1], [0], [0], [1], [0, 0, 1, 1], [], []>} : vector<8x8xf32>, vector<8x8xf32>, vector<8x8xf32> -> vector<8x8xf32>
    %c0_42 = arith.constant 0 : index
    %c24_43 = arith.constant 24 : index
    %82 = vector.load %arg20[%c0_42, %c24_43] : memref<8x32xf32, #tpu.memory_space<vmem>>, vector<8x8xf32>
    tpu.vector_store %arg20[%c0_42, %c24_43], %81 {strides = array<i32>} : memref<8x32xf32, #tpu.memory_space<vmem>>, vector<8x8xf32>,
    %c0_44 = arith.constant 0 : index
    %c0_45 = arith.constant 0 : index
    %83 = vector.load %arg20[%c0_44, %c0_45] : memref<8x32xf32, #tpu.memory_space<vmem>>, vector<8x32xf32>
    %84 = arith.addf %7, %83 : vector<8x32xf32>
    %cst_46 = arith.constant dense<0.000000e+00> : vector<8xf32>
    %85 = vector.multi_reduction <add>, %84, %cst_46 [1] : vector<8x32xf32> to vector<8xf32>
    %86 = vector.shape_cast %85 : vector<8xf32> to vector<8x1xf32>
    %cst_47 = arith.constant 3.200000e+01 : f32
    %87 = vector.broadcast %cst_47 : f32 to vector<8x1xf32>
    %88 = arith.divf %86, %87 : vector<8x1xf32>
    %89 = vector.broadcast %88 : vector<8x1xf32> to vector<8x32xf32>
    %90 = arith.subf %84, %89 : vector<8x32xf32>
    %91 = arith.mulf %90, %90 : vector<8x32xf32>
    %cst_48 = arith.constant dense<0.000000e+00> : vector<8xf32>
    %92 = vector.multi_reduction <add>, %91, %cst_48 [1] : vector<8x32xf32> to vector<8xf32>
    %93 = vector.shape_cast %92 : vector<8xf32> to vector<8x1xf32>
    %cst_49 = arith.constant 3.200000e+01 : f32
    %94 = vector.broadcast %cst_49 : f32 to vector<8x1xf32>
    %95 = arith.divf %93, %94 : vector<8x1xf32>
    %cst_50 = arith.constant 9.99999974E-6 : f32
    %96 = vector.broadcast %cst_50 : f32 to vector<8x1xf32>
    %97 = arith.addf %95, %96 : vector<8x1xf32>
    %98 = math.rsqrt %97 : vector<8x1xf32>
    %99 = vector.broadcast %98 : vector<8x1xf32> to vector<8x32xf32>
    %100 = arith.mulf %90, %99 : vector<8x32xf32>
    %c0_51 = arith.constant 0 : index
    %c0_52 = arith.constant 0 : index
    %101 = vector.load %arg9[%c0_51, %c0_52] : memref<1x32xf32, #tpu.memory_space<vmem>>, vector<1x32xf32>
    %102 = vector.broadcast %101 : vector<1x32xf32> to vector<8x32xf32>
    %103 = arith.mulf %100, %102 : vector<8x32xf32>
    %c0_53 = arith.constant 0 : index
    %c0_54 = arith.constant 0 : index
    %104 = vector.load %arg10[%c0_53, %c0_54] : memref<1x32xf32, #tpu.memory_space<vmem>>, vector<1x32xf32>
    %105 = vector.broadcast %104 : vector<1x32xf32> to vector<8x32xf32>
    %106 = arith.addf %103, %105 : vector<8x32xf32>
    %c0_55 = arith.constant 0 : index
    %c0_56 = arith.constant 0 : index
    %107 = vector.load %arg11[%c0_55, %c0_56] : memref<32x64xf32, #tpu.memory_space<vmem>>, vector<32x64xf32>
    %cst_57 = arith.constant dense<0.000000e+00> : vector<8x64xf32>
    %108 = tpu.matmul %106, %107, %cst_57 {dimension_numbers = #tpu.dot_dimension_numbers<[1], [0], [0], [1], [0, 0, 1, 1], [], []>} : vector<8x32xf32>, vector<32x64xf32>, vector<8x64xf32> -> vector<8x64xf32>
    %c0_58 = arith.constant 0 : index
    %c0_59 = arith.constant 0 : index
    %109 = vector.load %arg12[%c0_58, %c0_59] : memref<1x64xf32, #tpu.memory_space<vmem>>, vector<1x64xf32>
    %110 = vector.broadcast %109 : vector<1x64xf32> to vector<8x64xf32>
    %111 = arith.addf %108, %110 : vector<8x64xf32>
    %cst_60 = arith.constant 0.000000e+00 : f32
    %112 = vector.broadcast %cst_60 : f32 to vector<8x64xf32>
    %113 = arith.maximumf %111, %112 : vector<8x64xf32>
    %c0_61 = arith.constant 0 : index
    %c0_62 = arith.constant 0 : index
    %114 = vector.load %arg13[%c0_61, %c0_62] : memref<64x32xf32, #tpu.memory_space<vmem>>, vector<64x32xf32>
    %cst_63 = arith.constant dense<0.000000e+00> : vector<8x32xf32>
    %115 = tpu.matmul %113, %114, %cst_63 {dimension_numbers = #tpu.dot_dimension_numbers<[1], [0], [0], [1], [0, 0, 1, 1], [], []>} : vector<8x64xf32>, vector<64x32xf32>, vector<8x32xf32> -> vector<8x32xf32>
    %c0_64 = arith.constant 0 : index
    %c0_65 = arith.constant 0 : index
    %116 = vector.load %arg14[%c0_64, %c0_65] : memref<1x32xf32, #tpu.memory_space<vmem>>, vector<1x32xf32>
    %117 = vector.broadcast %116 : vector<1x32xf32> to vector<8x32xf32>
    %118 = arith.addf %115, %117 : vector<8x32xf32>
    %119 = arith.addf %106, %118 : vector<8x32xf32>
    %cst_66 = arith.constant dense<0.000000e+00> : vector<8xf32>
    %120 = vector.multi_reduction <add>, %119, %cst_66 [1] : vector<8x32xf32> to vector<8xf32>
    %121 = vector.shape_cast %120 : vector<8xf32> to vector<8x1xf32>
    %cst_67 = arith.constant 3.200000e+01 : f32
    %122 = vector.broadcast %cst_67 : f32 to vector<8x1xf32>
    %123 = arith.divf %121, %122 : vector<8x1xf32>
    %124 = vector.broadcast %123 : vector<8x1xf32> to vector<8x32xf32>
    %125 = arith.subf %119, %124 : vector<8x32xf32>
    %126 = arith.mulf %125, %125 : vector<8x32xf32>
    %cst_68 = arith.constant dense<0.000000e+00> : vector<8xf32>
    %127 = vector.multi_reduction <add>, %126, %cst_68 [1] : vector<8x32xf32> to vector<8xf32>
    %128 = vector.shape_cast %127 : vector<8xf32> to vector<8x1xf32>
    %cst_69 = arith.constant 3.200000e+01 : f32
    %129 = vector.broadcast %cst_69 : f32 to vector<8x1xf32>
    %130 = arith.divf %128, %129 : vector<8x1xf32>
    %cst_70 = arith.constant 9.99999997E-7 : f32
    %131 = vector.broadcast %cst_70 : f32 to vector<8x1xf32>
    %132 = arith.addf %130, %131 : vector<8x1xf32>
    %133 = math.rsqrt %132 : vector<8x1xf32>
    %134 = vector.broadcast %133 : vector<8x1xf32> to vector<8x32xf32>
    %135 = arith.mulf %125, %134 : vector<8x32xf32>
    %c0_71 = arith.constant 0 : index
    %c0_72 = arith.constant 0 : index
    %136 = vector.load %arg15[%c0_71, %c0_72] : memref<1x32xf32, #tpu.memory_space<vmem>>, vector<1x32xf32>
    %137 = vector.broadcast %136 : vector<1x32xf32> to vector<8x32xf32>
    %138 = arith.mulf %135, %137 : vector<8x32xf32>
    %c0_73 = arith.constant 0 : index
    %c0_74 = arith.constant 0 : index
    %139 = vector.load %arg16[%c0_73, %c0_74] : memref<1x32xf32, #tpu.memory_space<vmem>>, vector<1x32xf32>
    %140 = vector.broadcast %139 : vector<1x32xf32> to vector<8x32xf32>
    %141 = arith.addf %138, %140 : vector<8x32xf32>
    %c0_75 = arith.constant 0 : index
    %c0_76 = arith.constant 0 : index
    %c0_77 = arith.constant 0 : index
    %142 = vector.load %arg17[%c0_75, %c0_76, %c0_77] : memref<1x8x32xf32, #tpu.memory_space<vmem>>, vector<1x8x32xf32>
    %143 = vector.shape_cast %142 : vector<1x8x32xf32> to vector<8x32xf32>
    %144 = vector.shape_cast %141 : vector<8x32xf32> to vector<1x8x32xf32>
    tpu.vector_store %arg17[%c0_75, %c0_76, %c0_77], %144 {strides = array<i32>} : memref<1x8x32xf32, #tpu.memory_space<vmem>>, vector<1x8x32xf32>,
    return
  }
  func.func @transform_0(%arg0: i32, %arg1: i32) -> (i32, i32, i32) {
    %c0_i32 = arith.constant 0 : i32
    %c0_i32_0 = arith.constant 0 : i32
    %c0_i32_1 = arith.constant 0 : i32
    return %arg0, %c0_i32, %c0_i32_0 : i32, i32, i32
  }
  func.func @transform_1(%arg0: i32, %arg1: i32) -> (i32, i32) {
    %c0_i32 = arith.constant 0 : i32
    %c0_i32_0 = arith.constant 0 : i32
    %c0_i32_1 = arith.constant 0 : i32
    return %c0_i32, %c0_i32_0 : i32, i32
  }
  func.func @transform_2(%arg0: i32, %arg1: i32) -> (i32, i32) {
    %c0_i32 = arith.constant 0 : i32
    %c0_i32_0 = arith.constant 0 : i32
    %c0_i32_1 = arith.constant 0 : i32
    return %c0_i32, %c0_i32_0 : i32, i32
  }
  func.func @transform_3(%arg0: i32, %arg1: i32) -> (i32, i32) {
    %c0_i32 = arith.constant 0 : i32
    %c0_i32_0 = arith.constant 0 : i32
    %c0_i32_1 = arith.constant 0 : i32
    return %c0_i32, %c0_i32_0 : i32, i32
  }
  func.func @transform_4(%arg0: i32, %arg1: i32) -> (i32, i32) {
    %c0_i32 = arith.constant 0 : i32
    %c0_i32_0 = arith.constant 0 : i32
    %c0_i32_1 = arith.constant 0 : i32
    return %c0_i32, %c0_i32_0 : i32, i32
  }
  func.func @transform_5(%arg0: i32, %arg1: i32) -> (i32, i32) {
    %c0_i32 = arith.constant 0 : i32
    %c0_i32_0 = arith.constant 0 : i32
    %c0_i32_1 = arith.constant 0 : i32
    return %c0_i32, %c0_i32_0 : i32, i32
  }
  func.func @transform_6(%arg0: i32, %arg1: i32) -> (i32, i32) {
    %c0_i32 = arith.constant 0 : i32
    %c0_i32_0 = arith.constant 0 : i32
    %c0_i32_1 = arith.constant 0 : i32
    return %c0_i32, %c0_i32_0 : i32, i32
  }
  func.func @transform_7(%arg0: i32, %arg1: i32) -> (i32, i32) {
    %c0_i32 = arith.constant 0 : i32
    %c0_i32_0 = arith.constant 0 : i32
    %c0_i32_1 = arith.constant 0 : i32
    return %c0_i32, %c0_i32_0 : i32, i32
  }
  func.func @transform_8(%arg0: i32, %arg1: i32) -> (i32, i32) {
    %c0_i32 = arith.constant 0 : i32
    %c0_i32_0 = arith.constant 0 : i32
    %c0_i32_1 = arith.constant 0 : i32
    return %c0_i32, %c0_i32_0 : i32, i32
  }
  func.func @transform_9(%arg0: i32, %arg1: i32) -> (i32, i32) {
    %c0_i32 = arith.constant 0 : i32
    %c0_i32_0 = arith.constant 0 : i32
    %c0_i32_1 = arith.constant 0 : i32
    return %c0_i32, %c0_i32_0 : i32, i32
  }
  func.func @transform_10(%arg0: i32, %arg1: i32) -> (i32, i32) {
    %c0_i32 = arith.constant 0 : i32
    %c0_i32_0 = arith.constant 0 : i32
    %c0_i32_1 = arith.constant 0 : i32
    return %c0_i32, %c0_i32_0 : i32, i32
  }
  func.func @transform_11(%arg0: i32, %arg1: i32) -> (i32, i32) {
    %c0_i32 = arith.constant 0 : i32
    %c0_i32_0 = arith.constant 0 : i32
    %c0_i32_1 = arith.constant 0 : i32
    return %c0_i32, %c0_i32_0 : i32, i32
  }
  func.func @transform_12(%arg0: i32, %arg1: i32) -> (i32, i32) {
    %c0_i32 = arith.constant 0 : i32
    %c0_i32_0 = arith.constant 0 : i32
    %c0_i32_1 = arith.constant 0 : i32
    return %c0_i32, %c0_i32_0 : i32, i32
  }
  func.func @transform_13(%arg0: i32, %arg1: i32) -> (i32, i32) {
    %c0_i32 = arith.constant 0 : i32
    %c0_i32_0 = arith.constant 0 : i32
    %c0_i32_1 = arith.constant 0 : i32
    return %c0_i32, %c0_i32_0 : i32, i32
  }
  func.func @transform_14(%arg0: i32, %arg1: i32) -> (i32, i32) {
    %c0_i32 = arith.constant 0 : i32
    %c0_i32_0 = arith.constant 0 : i32
    %c0_i32_1 = arith.constant 0 : i32
    return %c0_i32, %c0_i32_0 : i32, i32
  }
  func.func @transform_15(%arg0: i32, %arg1: i32) -> (i32, i32, i32) {
    %c0_i32 = arith.constant 0 : i32
    %c0_i32_0 = arith.constant 0 : i32
    return %arg0, %arg1, %c0_i32 : i32, i32, i32
  }
}

</mosaic_0001>

<llo_original>
// kernel: tpu_custom_call.1
$region0: #{tpu_custom_call.1}
  #allocation0 [shape = 'u32[]', space=smem, size = 0x4, offset = 0x4, fixed_abs, tag = 'smem constant byte address 0x4 - core index']
  #allocation1 [shape = 'u32[144,128]{1,0:T(1,128)}', space=vmem, size = 0x12000, scoped, tag = 'internal scratch']
  #allocation2 [shape = 'f32[8,32]{1,0:T(8,128)}', space=vmem, size = 0x1000, scoped, tag = 'scratch operand']
  #allocation3 [shape = 'f32[8,32]{1,0:T(8,128)}', space=vmem, size = 0x1000, scoped, tag = 'scratch operand']
  #allocation4 [shape = 'f32[8,32]{1,0:T(8,128)}', space=vmem, size = 0x1000, scoped, tag = 'scratch operand']
  %s0 = inlined_call_operand.hbm [shape: f32[2,8,32], index: 0, kind: input, shape index: {}]
  %s1 = inlined_call_operand.vmem [shape: f32[32,32], index: 1, kind: input, shape index: {}]
  %s2 = inlined_call_operand.vmem [shape: f32[1,32], index: 2, kind: input, shape index: {}]
  %s3 = inlined_call_operand.vmem [shape: f32[32,32], index: 3, kind: input, shape index: {}]
  %s4 = inlined_call_operand.vmem [shape: f32[1,32], index: 4, kind: input, shape index: {}]
  %s5 = inlined_call_operand.vmem [shape: f32[32,32], index: 5, kind: input, shape index: {}]
  %s6 = inlined_call_operand.vmem [shape: f32[1,32], index: 6, kind: input, shape index: {}]
  %s7 = inlined_call_operand.vmem [shape: f32[1,32], index: 7, kind: input, shape index: {}]
  %s8 = inlined_call_operand.vmem [shape: f32[1,32], index: 8, kind: input, shape index: {}]
  %s9 = inlined_call_operand.hbm [shape: f32[32,64], index: 9, kind: input, shape index: {}]
  %s10 = inlined_call_operand.vmem [shape: f32[1,64], index: 10, kind: input, shape index: {}]
  %s11 = inlined_call_operand.vmem [shape: f32[64,32], index: 11, kind: input, shape index: {}]
  %s12 = inlined_call_operand.vmem [shape: f32[1,32], index: 12, kind: input, shape index: {}]
  %s13 = inlined_call_operand.vmem [shape: f32[1,32], index: 13, kind: input, shape index: {}]
  %s14 = inlined_call_operand.vmem [shape: f32[1,32], index: 14, kind: input, shape index: {}]
  %s15 = inlined_call_operand.hbm [shape: f32[2,8,32], index: 15, kind: output, shape index: {}]
  %s16 = sld [smem:[#allocation0]]
  $region105: #{tpu_custom_call.1} parent=0
    _
  %s18 = ssub.s32 1, %s16
  %s19 = scalar_select 0, %s18, %s16
  $region1: #{tpu_custom_call.1} parent=0
    #allocation5 [shape = 'u8[8192]{0}', space=vmem, size = 0x2000, scoped, tag = 'input window, operand 0']
    #allocation6 [shape = 's32[2]{0}', space=sflag, size = 0x8, scoped, tag = 'scoped memory for tpu_custom_call.1']
    #allocation7 [shape = 's32[2]{0}', space=sflag, size = 0x8, scoped, tag = 'scoped memory for tpu_custom_call.1']
    #allocation8 [shape = 'u8[16384]{0}', space=vmem, size = 0x4000, scoped, tag = 'input window, operand 9, single buffered']
    #allocation9 [shape = 's32[1]{0}', space=sflag, size = 0x4, scoped, tag = 'scoped memory for tpu_custom_call.1']
    #allocation10 [shape = 'u8[8192]{0}', space=vmem, size = 0x2000, scoped, tag = 'output window, operand 0']
    %20 = vsyncpa [#allocation6], 0
    %s21 = scalar_lea.sflag [#allocation6], 1
    %22 = vsyncpa %s21, 0
    %23 = vsyncpa [#allocation9], 0
    %24 = vsyncpa [#allocation7], 0
    %s25 = scalar_lea.sflag [#allocation7], 1
    %26 = vsyncpa %s25, 0
    loop: start=0, step=1, limit=4
    $region2: #{tpu_custom_call.1} parent=1 // loop_pre_header
      _
    $region3: #{tpu_custom_call.1} parent=1 // loop_header
      %s28 = sphi 0, %s32
      %p29 = scmp.ge.s32.totalorder %s28, 4
      %s35 = sphi 0, %s47
      %s36 = sphi 0, %s43
      %s37 = sphi 0, %s35
      %s38 = sphi 0, %s36
      %s39 = sphi 0, %s37
      %s40 = sphi 0, %s38
      %s50 = sphi 0, %s52
      %s53 = sphi 0, %s50
      %s54 = sphi 0, %s53
      %s70 = sphi 0, %s54
      %s74 = sphi 0, %s74
      %s76 = sphi 0, %s74
      %s77 = sphi 0, %s76
      %s91 = sphi 0, %s77
      %s95 = sphi 0, %s95
      %s97 = sphi 0, %s95
      %s98 = sphi 0, %s97
      %s112 = sphi 0, %s98
      %s116 = sphi 0, %s116
      %s118 = sphi 0, %s116
      %s119 = sphi 0, %s118
      %s133 = sphi 0, %s119
      %s137 = sphi 0, %s137
      %s139 = sphi 0, %s137
      %s140 = sphi 0, %s139
      %s154 = sphi 0, %s140
      %s158 = sphi 0, %s158
      %s160 = sphi 0, %s158
      %s161 = sphi 0, %s160
      %s175 = sphi 0, %s161
      %s179 = sphi 0, %s179
      %s181 = sphi 0, %s179
      %s182 = sphi 0, %s181
      %s196 = sphi 0, %s182
      %s200 = sphi 0, %s200
      %s202 = sphi 0, %s200
      %s203 = sphi 0, %s202
      %s217 = sphi 0, %s203
      %s221 = sphi 0, %s221
      %s223 = sphi 0, %s221
      %s224 = sphi 0, %s223
      %s238 = sphi 0, %s224
      %s242 = sphi 0, %s242
      %s244 = sphi 0, %s242
      %s245 = sphi 0, %s244
      %s259 = sphi 0, %s245
      %s263 = sphi 0, %s263
      %s265 = sphi 0, %s263
      %s266 = sphi 0, %s265
      %s280 = sphi 0, %s266
      %s284 = sphi 0, %s284
      %s286 = sphi 0, %s284
      %s287 = sphi 0, %s286
      %s301 = sphi 0, %s287
      %s305 = sphi 0, %s305
      %s307 = sphi 0, %s305
      %s308 = sphi 0, %s307
      %s322 = sphi 0, %s308
      %s326 = sphi 0, %s326
      %s328 = sphi 0, %s326
      %s329 = sphi 0, %s328
      %s343 = sphi 0, %s329
      %s347 = sphi 0, %s347
      %s349 = sphi 0, %s347
      %s350 = sphi 0, %s349
      %s364 = sphi 0, %s350
      %s372 = sphi 0, %s374
      %s375 = sphi 0, %s372
      %s376 = sphi 0, %s375
      %s392 = sphi 0, %s376
    $region4: #{tpu_custom_call.1} parent=1 // loop_header_branch
      %31 = sbr.rel (%p29) target = $region8
    $region5: #{tpu_custom_call.1} parent=1 // loop_body
      %s33 = ssub.s32 %s28, 1
      %s34 = ssub.s32 %s28, 2
      %s41 = sadd.s32 1, %s36
      %p42 = scmp.ge.s32.totalorder %s41, 1
      %s43 = scalar_select %p42, 0, %s41
      %s44 = sadd.s32 1, %s35
      %s45 = scalar_select %p42, %s44, %s35
      %p46 = scmp.ge.s32.totalorder %s45, 2
      %s47 = scalar_select %p46, 0, %s45
      %s48 = ssub.s32 %s35, %s47
      %p49 = scmp.eq.s32.totalorder %s48, 0
      %s51 = sadd.s32 %s50, 1
      %s52 = scalar_select %p49, %s50, %s51
      %p55 = pneg %p49
      %p56 = scmp.eq.s32.totalorder %s28, 1
      %p57 = por %p55, %p56
      %p58 = scmp.ne.s32.totalorder %s50, %s53
      %p59 = scmp.eq.s32.totalorder %s28, 0
      %p60 = por %p58, %p59
      %p61 = scmp.ne.s32.totalorder %s50, %s53
      %p62 = scmp.eq.s32.totalorder %s33, 1
      %p63 = por %p61, %p62
      %p64 = scmp.ne.s32.totalorder %s53, %s54
      %p65 = scmp.eq.s32.totalorder %s33, 0
      %p66 = por %p64, %p65
      %p67 = scmp.ne.s32.totalorder %s53, %s54
      %p68 = scmp.eq.s32.totalorder %s34, 1
      %p69 = por %p67, %p68
      %p71 = scmp.ne.s32.totalorder %s54, %s70
      %p72 = scmp.eq.s32.totalorder %s34, 0
      %p73 = por %p71, %p72
      %s75 = sadd.s32 %s74, 1
      %p78 = scmp.eq.s32.totalorder %s28, 1
      %p79 = scmp.ne.s32.totalorder %s74, %s76
      %p80 = scmp.eq.s32.totalorder %s28, 0
      %p81 = por %p79, %p80
      %p82 = scmp.ne.s32.totalorder %s74, %s76
      %p83 = scmp.eq.s32.totalorder %s33, 1
      %p84 = por %p82, %p83
      %p85 = scmp.ne.s32.totalorder %s76, %s77
      %p86 = scmp.eq.s32.totalorder %s33, 0
      %p87 = por %p85, %p86
      %p88 = scmp.ne.s32.totalorder %s76, %s77
      %p89 = scmp.eq.s32.totalorder %s34, 1
      %p90 = por %p88, %p89
      %p92 = scmp.ne.s32.totalorder %s77, %s91
      %p93 = scmp.eq.s32.totalorder %s34, 0
      %p94 = por %p92, %p93
      %s96 = sadd.s32 %s95, 1
      %p99 = scmp.eq.s32.totalorder %s28, 1
      %p100 = scmp.ne.s32.totalorder %s95, %s97
      %p101 = scmp.eq.s32.totalorder %s28, 0
      %p102 = por %p100, %p101
      %p103 = scmp.ne.s32.totalorder %s95, %s97
      %p104 = scmp.eq.s32.totalorder %s33, 1
      %p105 = por %p103, %p104
      %p106 = scmp.ne.s32.totalorder %s97, %s98
      %p107 = scmp.eq.s32.totalorder %s33, 0
      %p108 = por %p106, %p107
      %p109 = scmp.ne.s32.totalorder %s97, %s98
      %p110 = scmp.eq.s32.totalorder %s34, 1
      %p111 = por %p109, %p110
      %p113 = scmp.ne.s32.totalorder %s98, %s112
      %p114 = scmp.eq.s32.totalorder %s34, 0
      %p115 = por %p113, %p114
      %s117 = sadd.s32 %s116, 1
      %p120 = scmp.eq.s32.totalorder %s28, 1
      %p121 = scmp.ne.s32.totalorder %s116, %s118
      %p122 = scmp.eq.s32.totalorder %s28, 0
      %p123 = por %p121, %p122
      %p124 = scmp.ne.s32.totalorder %s116, %s118
      %p125 = scmp.eq.s32.totalorder %s33, 1
      %p126 = por %p124, %p125
      %p127 = scmp.ne.s32.totalorder %s118, %s119
      %p128 = scmp.eq.s32.totalorder %s33, 0
      %p129 = por %p127, %p128
      %p130 = scmp.ne.s32.totalorder %s118, %s119
      %p131 = scmp.eq.s32.totalorder %s34, 1
      %p132 = por %p130, %p131
      %p134 = scmp.ne.s32.totalorder %s119, %s133
      %p135 = scmp.eq.s32.totalorder %s34, 0
      %p136 = por %p134, %p135
      %s138 = sadd.s32 %s137, 1
      %p141 = scmp.eq.s32.totalorder %s28, 1
      %p142 = scmp.ne.s32.totalorder %s137, %s139
      %p143 = scmp.eq.s32.totalorder %s28, 0
      %p144 = por %p142, %p143
      %p145 = scmp.ne.s32.totalorder %s137, %s139
      %p146 = scmp.eq.s32.totalorder %s33, 1
      %p147 = por %p145, %p146
      %p148 = scmp.ne.s32.totalorder %s139, %s140
      %p149 = scmp.eq.s32.totalorder %s33, 0
      %p150 = por %p148, %p149
      %p151 = scmp.ne.s32.totalorder %s139, %s140
      %p152 = scmp.eq.s32.totalorder %s34, 1
      %p153 = por %p151, %p152
      %p155 = scmp.ne.s32.totalorder %s140, %s154
      %p156 = scmp.eq.s32.totalorder %s34, 0
      %p157 = por %p155, %p156
      %s159 = sadd.s32 %s158, 1
      %p162 = scmp.eq.s32.totalorder %s28, 1
      %p163 = scmp.ne.s32.totalorder %s158, %s160
      %p164 = scmp.eq.s32.totalorder %s28, 0
      %p165 = por %p163, %p164
      %p166 = scmp.ne.s32.totalorder %s158, %s160
      %p167 = scmp.eq.s32.totalorder %s33, 1
      %p168 = por %p166, %p167
      %p169 = scmp.ne.s32.totalorder %s160, %s161
      %p170 = scmp.eq.s32.totalorder %s33, 0
      %p171 = por %p169, %p170
      %p172 = scmp.ne.s32.totalorder %s160, %s161
      %p173 = scmp.eq.s32.totalorder %s34, 1
      %p174 = por %p172, %p173
      %p176 = scmp.ne.s32.totalorder %s161, %s175
      %p177 = scmp.eq.s32.totalorder %s34, 0
      %p178 = por %p176, %p177
      %s180 = sadd.s32 %s179, 1
      %p183 = scmp.eq.s32.totalorder %s28, 1
      %p184 = scmp.ne.s32.totalorder %s179, %s181
      %p185 = scmp.eq.s32.totalorder %s28, 0
      %p186 = por %p184, %p185
      %p187 = scmp.ne.s32.totalorder %s179, %s181
      %p188 = scmp.eq.s32.totalorder %s33, 1
      %p189 = por %p187, %p188
      %p190 = scmp.ne.s32.totalorder %s181, %s182
      %p191 = scmp.eq.s32.totalorder %s33, 0
      %p192 = por %p190, %p191
      %p193 = scmp.ne.s32.totalorder %s181, %s182
      %p194 = scmp.eq.s32.totalorder %s34, 1
      %p195 = por %p193, %p194
      %p197 = scmp.ne.s32.totalorder %s182, %s196
      %p198 = scmp.eq.s32.totalorder %s34, 0
      %p199 = por %p197, %p198
      %s201 = sadd.s32 %s200, 1
      %p204 = scmp.eq.s32.totalorder %s28, 1
      %p205 = scmp.ne.s32.totalorder %s200, %s202
      %p206 = scmp.eq.s32.totalorder %s28, 0
      %p207 = por %p205, %p206
      %p208 = scmp.ne.s32.totalorder %s200, %s202
      %p209 = scmp.eq.s32.totalorder %s33, 1
      %p210 = por %p208, %p209
      %p211 = scmp.ne.s32.totalorder %s202, %s203
      %p212 = scmp.eq.s32.totalorder %s33, 0
      %p213 = por %p211, %p212
      %p214 = scmp.ne.s32.totalorder %s202, %s203
      %p215 = scmp.eq.s32.totalorder %s34, 1
      %p216 = por %p214, %p215
      %p218 = scmp.ne.s32.totalorder %s203, %s217
      %p219 = scmp.eq.s32.totalorder %s34, 0
      %p220 = por %p218, %p219
      %s222 = sadd.s32 %s221, 1
      %p225 = scmp.eq.s32.totalorder %s28, 1
      %p226 = scmp.ne.s32.totalorder %s221, %s223
      %p227 = scmp.eq.s32.totalorder %s28, 0
      %p228 = por %p226, %p227
      %p229 = scmp.ne.s32.totalorder %s221, %s223
      %p230 = scmp.eq.s32.totalorder %s33, 1
      %p231 = por %p229, %p230
      %p232 = scmp.ne.s32.totalorder %s223, %s224
      %p233 = scmp.eq.s32.totalorder %s33, 0
      %p234 = por %p232, %p233
      %p235 = scmp.ne.s32.totalorder %s223, %s224
      %p236 = scmp.eq.s32.totalorder %s34, 1
      %p237 = por %p235, %p236
      %p239 = scmp.ne.s32.totalorder %s224, %s238
      %p240 = scmp.eq.s32.totalorder %s34, 0
      %p241 = por %p239, %p240
      %s243 = sadd.s32 %s242, 1
      %p246 = scmp.eq.s32.totalorder %s28, 1
      %p247 = scmp.ne.s32.totalorder %s242, %s244
      %p248 = scmp.eq.s32.totalorder %s28, 0
      %p249 = por %p247, %p248
      %p250 = scmp.ne.s32.totalorder %s242, %s244
      %p251 = scmp.eq.s32.totalorder %s33, 1
      %p252 = por %p250, %p251
      %p253 = scmp.ne.s32.totalorder %s244, %s245
      %p254 = scmp.eq.s32.totalorder %s33, 0
      %p255 = por %p253, %p254
      %p256 = scmp.ne.s32.totalorder %s244, %s245
      %p257 = scmp.eq.s32.totalorder %s34, 1
      %p258 = por %p256, %p257
      %p260 = scmp.ne.s32.totalorder %s245, %s259
      %p261 = scmp.eq.s32.totalorder %s34, 0
      %p262 = por %p260, %p261
      %s264 = sadd.s32 %s263, 1
      %p267 = scmp.eq.s32.totalorder %s28, 1
      %p268 = scmp.ne.s32.totalorder %s263, %s265
      %p269 = scmp.eq.s32.totalorder %s28, 0
      %p270 = por %p268, %p269
      %p271 = scmp.ne.s32.totalorder %s263, %s265
      %p272 = scmp.eq.s32.totalorder %s33, 1
      %p273 = por %p271, %p272
      %p274 = scmp.ne.s32.totalorder %s265, %s266
      %p275 = scmp.eq.s32.totalorder %s33, 0
      %p276 = por %p274, %p275
      %p277 = scmp.ne.s32.totalorder %s265, %s266
      %p278 = scmp.eq.s32.totalorder %s34, 1
      %p279 = por %p277, %p278
      %p281 = scmp.ne.s32.totalorder %s266, %s280
      %p282 = scmp.eq.s32.totalorder %s34, 0
      %p283 = por %p281, %p282
      %s285 = sadd.s32 %s284, 1
      %p288 = scmp.eq.s32.totalorder %s28, 1
      %p289 = scmp.ne.s32.totalorder %s284, %s286
      %p290 = scmp.eq.s32.totalorder %s28, 0
      %p291 = por %p289, %p290
      %p292 = scmp.ne.s32.totalorder %s284, %s286
      %p293 = scmp.eq.s32.totalorder %s33, 1
      %p294 = por %p292, %p293
      %p295 = scmp.ne.s32.totalorder %s286, %s287
      %p296 = scmp.eq.s32.totalorder %s33, 0
      %p297 = por %p295, %p296
      %p298 = scmp.ne.s32.totalorder %s286, %s287
      %p299 = scmp.eq.s32.totalorder %s34, 1
      %p300 = por %p298, %p299
      %p302 = scmp.ne.s32.totalorder %s287, %s301
      %p303 = scmp.eq.s32.totalorder %s34, 0
      %p304 = por %p302, %p303
      %s306 = sadd.s32 %s305, 1
      %p309 = scmp.eq.s32.totalorder %s28, 1
      %p310 = scmp.ne.s32.totalorder %s305, %s307
      %p311 = scmp.eq.s32.totalorder %s28, 0
      %p312 = por %p310, %p311
      %p313 = scmp.ne.s32.totalorder %s305, %s307
      %p314 = scmp.eq.s32.totalorder %s33, 1
      %p315 = por %p313, %p314
      %p316 = scmp.ne.s32.totalorder %s307, %s308
      %p317 = scmp.eq.s32.totalorder %s33, 0
      %p318 = por %p316, %p317
      %p319 = scmp.ne.s32.totalorder %s307, %s308
      %p320 = scmp.eq.s32.totalorder %s34, 1
      %p321 = por %p319, %p320
      %p323 = scmp.ne.s32.totalorder %s308, %s322
      %p324 = scmp.eq.s32.totalorder %s34, 0
      %p325 = por %p323, %p324
      %s327 = sadd.s32 %s326, 1
      %p330 = scmp.eq.s32.totalorder %s28, 1
      %p331 = scmp.ne.s32.totalorder %s326, %s328
      %p332 = scmp.eq.s32.totalorder %s28, 0
      %p333 = por %p331, %p332
      %p334 = scmp.ne.s32.totalorder %s326, %s328
      %p335 = scmp.eq.s32.totalorder %s33, 1
      %p336 = por %p334, %p335
      %p337 = scmp.ne.s32.totalorder %s328, %s329
      %p338 = scmp.eq.s32.totalorder %s33, 0
      %p339 = por %p337, %p338
      %p340 = scmp.ne.s32.totalorder %s328, %s329
      %p341 = scmp.eq.s32.totalorder %s34, 1
      %p342 = por %p340, %p341
      %p344 = scmp.ne.s32.totalorder %s329, %s343
      %p345 = scmp.eq.s32.totalorder %s34, 0
      %p346 = por %p344, %p345
      %s348 = sadd.s32 %s347, 1
      %p351 = scmp.eq.s32.totalorder %s28, 1
      %p352 = scmp.ne.s32.totalorder %s347, %s349
      %p353 = scmp.eq.s32.totalorder %s28, 0
      %p354 = por %p352, %p353
      %p355 = scmp.ne.s32.totalorder %s347, %s349
      %p356 = scmp.eq.s32.totalorder %s33, 1
      %p357 = por %p355, %p356
      %p358 = scmp.ne.s32.totalorder %s349, %s350
      %p359 = scmp.eq.s32.totalorder %s33, 0
      %p360 = por %p358, %p359
      %p361 = scmp.ne.s32.totalorder %s349, %s350
      %p362 = scmp.eq.s32.totalorder %s34, 1
      %p363 = por %p361, %p362
      %p365 = scmp.ne.s32.totalorder %s350, %s364
      %p366 = scmp.eq.s32.totalorder %s34, 0
      %p367 = por %p365, %p366
      %s368 = ssub.s32 %s35, %s47
      %s369 = ssub.s32 %s36, %s43
      %s370 = sor.u32 %s368, %s369
      %p371 = scmp.eq.s32.totalorder %s370, 0
      %s373 = sadd.s32 %s372, 1
      %s374 = scalar_select %p371, %s372, %s373
      %p377 = pneg %p371
      %p378 = scmp.eq.s32.totalorder %s28, 1
      %p379 = por %p377, %p378
      %p380 = scmp.ne.s32.totalorder %s372, %s375
      %p381 = scmp.eq.s32.totalorder %s28, 0
      %p382 = por %p380, %p381
      %p383 = scmp.ne.s32.totalorder %s372, %s375
      %p384 = scmp.eq.s32.totalorder %s33, 1
      %p385 = por %p383, %p384
      %p386 = scmp.ne.s32.totalorder %s375, %s376
      %p387 = scmp.eq.s32.totalorder %s33, 0
      %p388 = por %p386, %p387
      %p389 = scmp.ne.s32.totalorder %s375, %s376
      %p390 = scmp.eq.s32.totalorder %s34, 1
      %p391 = por %p389, %p390
      %p393 = scmp.ne.s32.totalorder %s376, %s392
      %p394 = scmp.eq.s32.totalorder %s34, 0
      %p395 = por %p393, %p394
      %p396 = scmp.le.s32.totalorder 1, %s28
      %p397 = scmp.lt.s32.totalorder %s28, 3
      %p398 = pnand %p396, %p397
      %p399 = pneg %p398
      // Predicated region
      $region9: #{tpu_custom_call.1} parent=5 // pred_check
        _
      $region10: #{tpu_custom_call.1} parent=5 // pred_check_branch
        %401 = sbr.rel (%p398) target = $region12
      $region11: #{tpu_custom_call.1} parent=5 // pred_region
        %s402 = ssub.s32 %s28, 1
        // Predicated region
        $region13: #{tpu_custom_call.1} parent=11 // pred_check
          %p403 = pneg %p87
        $region14: #{tpu_custom_call.1} parent=11 // pred_check_branch
          %405 = sbr.rel (%p403) target = $region16
        $region15: #{tpu_custom_call.1} parent=11 // pred_region
          _
        $region16: #{tpu_custom_call.1} parent=11 // pred_fallthru
          _
        // Predicated region
        $region17: #{tpu_custom_call.1} parent=11 // pred_check
          %p406 = pneg %p108
        $region18: #{tpu_custom_call.1} parent=11 // pred_check_branch
          %408 = sbr.rel (%p406) target = $region20
        $region19: #{tpu_custom_call.1} parent=11 // pred_region
          _
        $region20: #{tpu_custom_call.1} parent=11 // pred_fallthru
          _
        // Predicated region
        $region21: #{tpu_custom_call.1} parent=11 // pred_check
          %p409 = pneg %p129
        $region22: #{tpu_custom_call.1} parent=11 // pred_check_branch
          %411 = sbr.rel (%p409) target = $region24
        $region23: #{tpu_custom_call.1} parent=11 // pred_region
          _
        $region24: #{tpu_custom_call.1} parent=11 // pred_fallthru
          _
        // Predicated region
        $region25: #{tpu_custom_call.1} parent=11 // pred_check
          %p412 = pneg %p150
        $region26: #{tpu_custom_call.1} parent=11 // pred_check_branch
          %414 = sbr.rel (%p412) target = $region28
        $region27: #{tpu_custom_call.1} parent=11 // pred_region
          _
        $region28: #{tpu_custom_call.1} parent=11 // pred_fallthru
          _
        // Predicated region
        $region29: #{tpu_custom_call.1} parent=11 // pred_check
          %p415 = pneg %p171
        $region30: #{tpu_custom_call.1} parent=11 // pred_check_branch
          %417 = sbr.rel (%p415) target = $region32
        $region31: #{tpu_custom_call.1} parent=11 // pred_region
          _
        $region32: #{tpu_custom_call.1} parent=11 // pred_fallthru
          _
        // Predicated region
        $region33: #{tpu_custom_call.1} parent=11 // pred_check
          %p418 = pneg %p192
        $region34: #{tpu_custom_call.1} parent=11 // pred_check_branch
          %420 = sbr.rel (%p418) target = $region36
        $region35: #{tpu_custom_call.1} parent=11 // pred_region
          _
        $region36: #{tpu_custom_call.1} parent=11 // pred_fallthru
          _
        // Predicated region
        $region37: #{tpu_custom_call.1} parent=11 // pred_check
          %p421 = pneg %p213
        $region38: #{tpu_custom_call.1} parent=11 // pred_check_branch
          %423 = sbr.rel (%p421) target = $region40
        $region39: #{tpu_custom_call.1} parent=11 // pred_region
          _
        $region40: #{tpu_custom_call.1} parent=11 // pred_fallthru
          _
        // Predicated region
        $region41: #{tpu_custom_call.1} parent=11 // pred_check
          %p424 = pneg %p234
        $region42: #{tpu_custom_call.1} parent=11 // pred_check_branch
          %426 = sbr.rel (%p424) target = $region44
        $region43: #{tpu_custom_call.1} parent=11 // pred_region
          _
        $region44: #{tpu_custom_call.1} parent=11 // pred_fallthru
          _
        // Predicated region
        $region45: #{tpu_custom_call.1} parent=11 // pred_check
          %p427 = pneg %p255
        $region46: #{tpu_custom_call.1} parent=11 // pred_check_branch
          %429 = sbr.rel (%p427) target = $region48
        $region47: #{tpu_custom_call.1} parent=11 // pred_region
          %s431 = ssub.s32 512, 512
          %432 = vsyncadd [#allocation9], %s431
          %s433 = sshll.u32 [#allocation8], 4
          %s434 = int_to_ptr.vmem [resolvable:$true] %s433
          %439 = dma.hbm_to_vmem [thread:$0]  %s9, 512, %s434, [#allocation9], 128, 128, 8
        $region48: #{tpu_custom_call.1} parent=11 // pred_fallthru
          _
        // Predicated region
        $region49: #{tpu_custom_call.1} parent=11 // pred_check
          %p440 = pneg %p276
        $region50: #{tpu_custom_call.1} parent=11 // pred_check_branch
          %442 = sbr.rel (%p440) target = $region52
        $region51: #{tpu_custom_call.1} parent=11 // pred_region
          _
        $region52: #{tpu_custom_call.1} parent=11 // pred_fallthru
          _
        // Predicated region
        $region53: #{tpu_custom_call.1} parent=11 // pred_check
          %p443 = pneg %p297
        $region54: #{tpu_custom_call.1} parent=11 // pred_check_branch
          %445 = sbr.rel (%p443) target = $region56
        $region55: #{tpu_custom_call.1} parent=11 // pred_region
          _
        $region56: #{tpu_custom_call.1} parent=11 // pred_fallthru
          _
        // Predicated region
        $region57: #{tpu_custom_call.1} parent=11 // pred_check
          %p446 = pneg %p318
        $region58: #{tpu_custom_call.1} parent=11 // pred_check_branch
          %448 = sbr.rel (%p446) target = $region60
        $region59: #{tpu_custom_call.1} parent=11 // pred_region
          _
        $region60: #{tpu_custom_call.1} parent=11 // pred_fallthru
          _
        // Predicated region
        $region61: #{tpu_custom_call.1} parent=11 // pred_check
          %p449 = pneg %p339
        $region62: #{tpu_custom_call.1} parent=11 // pred_check_branch
          %451 = sbr.rel (%p449) target = $region64
        $region63: #{tpu_custom_call.1} parent=11 // pred_region
          _
        $region64: #{tpu_custom_call.1} parent=11 // pred_fallthru
          _
        // Predicated region
        $region65: #{tpu_custom_call.1} parent=11 // pred_check
          %p452 = pneg %p360
        $region66: #{tpu_custom_call.1} parent=11 // pred_check_branch
          %454 = sbr.rel (%p452) target = $region68
        $region67: #{tpu_custom_call.1} parent=11 // pred_region
          _
        $region68: #{tpu_custom_call.1} parent=11 // pred_fallthru
          _
      $region12: #{tpu_custom_call.1} parent=5 // pred_fallthru
        _
      %p455 = scmp.lt.s32.totalorder %s28, 2
      // Predicated region
      $region69: #{tpu_custom_call.1} parent=5 // pred_check
        %p456 = pneg %p455
      $region70: #{tpu_custom_call.1} parent=5 // pred_check_branch
        %458 = sbr.rel (%p456) target = $region72
      $region71: #{tpu_custom_call.1} parent=5 // pred_region
        // Predicated region
        $region73: #{tpu_custom_call.1} parent=71 // pred_check
          %p459 = pneg %p60
        $region74: #{tpu_custom_call.1} parent=71 // pred_check_branch
          %461 = sbr.rel (%p459) target = $region76
        $region75: #{tpu_custom_call.1} parent=71 // pred_region
          %s462 = sand.u32 %s50, 1
          %s463 = scalar_lea.sflag [#allocation6], %s462
          %s464 = sand.u32 %s50, 1
          %s465 = smul.addr %s464, 8
          %s466 = scalar_lea.vmem [#allocation5], %s465
          %s468 = ssub.s32 128, 128
          %469 = vsyncadd %s463, %s468
          %s470 = smul.addr %s35, 128
          %s471 = scalar_lea.hbm %s0, %s470
          %s473 = sshll.u32 %s466, 4
          %s474 = int_to_ptr.vmem [resolvable:$true] %s473
          %476 = dma.hbm_to_vmem [thread:$0]  %s471, 128, %s474, %s463
        $region76: #{tpu_custom_call.1} parent=71 // pred_fallthru
          _
      $region72: #{tpu_custom_call.1} parent=5 // pred_fallthru
        _
      %p477 = scmp.le.s32.totalorder 1, %s28
      %p478 = scmp.lt.s32.totalorder %s28, 3
      %p479 = pnand %p477, %p478
      %p480 = pneg %p479
      // Predicated region
      $region77: #{tpu_custom_call.1} parent=5 // pred_check
        _
      $region78: #{tpu_custom_call.1} parent=5 // pred_check_branch
        %482 = sbr.rel (%p479) target = $region80
      $region79: #{tpu_custom_call.1} parent=5 // pred_region
        %s483 = ssub.s32 %s28, 1
        %s484 = sand.u32 %s53, 1
        %s485 = scalar_lea.sflag [#allocation6], %s484
        %s486 = sand.u32 %s53, 1
        %s487 = smul.addr %s486, 8
        %s488 = scalar_lea.vmem [#allocation5], %s487
        // Predicated region
        $region81: #{tpu_custom_call.1} parent=79 // pred_check
          %p489 = pneg %p66
        $region82: #{tpu_custom_call.1} parent=79 // pred_check_branch
          %491 = sbr.rel (%p489) target = $region84
        $region83: #{tpu_custom_call.1} parent=79 // pred_region
          %492 = dma.done %s485, 128
        $region84: #{tpu_custom_call.1} parent=79 // pred_fallthru
          _
        // Predicated region
        $region85: #{tpu_custom_call.1} parent=79 // pred_check
          %p493 = pneg %p255
        $region86: #{tpu_custom_call.1} parent=79 // pred_check_branch
          %495 = sbr.rel (%p493) target = $region88
        $region87: #{tpu_custom_call.1} parent=79 // pred_region
          %496 = dma.done [#allocation9], 512
        $region88: #{tpu_custom_call.1} parent=79 // pred_fallthru
          _
        %s497 = sand.u32 %s53, 1
        %s498 = scalar_lea.sflag [#allocation6], %s497
        %s499 = sand.u32 %s53, 1
        %s500 = smul.addr %s499, 8
        %s501 = scalar_lea.vmem [#allocation5], %s500
        %p502 = pneg %p66
        %p503 = pneg %p63
        %p504 = pneg %p87
        %p505 = pneg %p84
        %p506 = pneg %p108
        %p507 = pneg %p105
        %p508 = pneg %p129
        %p509 = pneg %p126
        %p510 = pneg %p150
        %p511 = pneg %p147
        %p512 = pneg %p171
        %p513 = pneg %p168
        %p514 = pneg %p192
        %p515 = pneg %p189
        %p516 = pneg %p213
        %p517 = pneg %p210
        %p518 = pneg %p234
        %p519 = pneg %p231
        %p520 = pneg %p255
        %p521 = pneg %p252
        %p522 = pneg %p276
        %p523 = pneg %p273
        %p524 = pneg %p297
        %p525 = pneg %p294
        %p526 = pneg %p318
        %p527 = pneg %p315
        %p528 = pneg %p339
        %p529 = pneg %p336
        %p530 = pneg %p360
        %p531 = pneg %p357
        %p532 = pneg %p388
        %p533 = pneg %p385
        %s534 = sand.u32 %s375, 1
        %s535 = scalar_lea.sflag [#allocation7], %s534
        %s536 = sand.u32 %s375, 1
        %s537 = smul.addr %s536, 8
        %s538 = scalar_lea.vmem [#allocation10], %s537
        %p539 = scmp.eq.s32.totalorder %s38, 0
        // Predicated region
        $region89: #{tpu_custom_call.1} parent=79 // pred_check
          %p540 = pneg %p539
        $region90: #{tpu_custom_call.1} parent=79 // pred_check_branch
          %542 = sbr.rel (%p540) target = $region92
        $region91: #{tpu_custom_call.1} parent=79 // pred_region
          %v543 = vld [vmem:[%s488] sm:$0xff]
          %v544 = vld [vmem:[%s3] sm:$0xff]
          %v545 = vld [vmem:[%s3 + $0x8] sm:$0xff]
          %v546 = vld [vmem:[%s3 + $0x10] sm:$0xff]
          %v547 = vld [vmem:[%s3 + $0x18] sm:$0xff]
          %v548 = vld [vmem:[%s5] sm:$0xff]
          %v549 = vld [vmem:[%s5 + $0x8] sm:$0xff]
          %v550 = vld [vmem:[%s5 + $0x10] sm:$0xff]
          %v551 = vld [vmem:[%s5 + $0x18] sm:$0xff]
          %v552 = vld [vmem:[%s4] sm:$0x1]
          %v554 = vlaneseq
          %v555 = vshrl.u32 %v554, 7
          %v556 = vsub.s32 0, %v555
          %v557 = vrot.slane %v552, %v556
          %vm559 = vcmask 261120
          %v561 = vsel %vm559, %v543, 0
          %563 = vmatprep.subr.mxu0 0.0
          %564 = vmatpush1.msra.mxu0 %v544
          %565 = vmatprep.subr.mxu0 0.0
          %566 = vmatpush1.msra.mxu0 %v545
          %567 = vmatprep.subr.mxu0 0.0
          %568 = vmatpush1.msra.mxu0 %v546
          %569 = vmatprep.subr.mxu0 0.0
          %570 = vmatpush1.msra.mxu0 %v547
          %571 = vmatprep.subr.mxu0 0.0
          %572 = vmatpush1.msra.mxu0 0.0
          %573 = vmatprep.subr.mxu0 0.0
          %574 = vmatpush1.msra.mxu0 0.0
          %575 = vmatprep.subr.mxu0 0.0
          %576 = vmatpush1.msra.mxu0 0.0
          %577 = vmatprep.subr.mxu0 0.0
          %578 = vmatpush1.msra.mxu0 0.0
          %579 = vmatprep.subr.mxu0 0.0
          %580 = vmatpush1.msra.mxu0 0.0
          %581 = vmatprep.subr.mxu0 0.0
          %582 = vmatpush1.msra.mxu0 0.0
          %583 = vmatprep.subr.mxu0 0.0
          %584 = vmatpush1.msra.mxu0 0.0
          %585 = vmatprep.subr.mxu0 0.0
          %586 = vmatpush1.msra.mxu0 0.0
          %587 = vmatprep.subr.mxu0 0.0
          %588 = vmatpush1.msra.mxu0 0.0
          %589 = vmatprep.subr.mxu0 0.0
          %590 = vmatpush1.msra.mxu0 0.0
          %591 = vmatprep.subr.mxu0 0.0
          %592 = vmatpush1.msra.mxu0 0.0
          %593 = vmatprep.subr.mxu0 0.0
          %594 = vmatpush1.msra.mxu0 0.0
          %595 = vmatprep.subr.mxu0 0.0
          %596 = vmatpush1.msra.mxu0 0.0
          %597 = vmatprep.subr.mxu0 0.0
          %598 = vmatpush1.msra.mxu0 0.0
          %599 = vmatprep.subr.mxu0 0.0
          %600 = vmatpush1.msra.mxu0 0.0
          %601 = vmatprep.subr.mxu0 0.0
          %602 = vmatpush1.msra.mxu0 0.0
          %603 = vmatprep.subr.mxu0 0.0
          %604 = vmatpush1.msra.mxu0 0.0
          %605 = vmatprep.subr.mxu0 0.0
          %606 = vmatpush1.msra.mxu0 0.0
          %607 = vmatprep.subr.mxu0 0.0
          %608 = vmatpush1.msra.mxu0 0.0
          %609 = vmatprep.subr.mxu0 0.0
          %610 = vmatpush1.msra.mxu0 0.0
          %611 = vmatprep.subr.mxu0 0.0
          %612 = vmatpush1.msra.mxu0 0.0
          %613 = vmatprep.subr.mxu0 0.0
          %614 = vmatpush1.msra.mxu0 0.0
          %615 = vmatprep.subr.mxu0 0.0
          %616 = vmatpush1.msra.mxu0 0.0
          %617 = vmatprep.subr.mxu0 0.0
          %618 = vmatpush1.msra.mxu0 0.0
          %619 = vmatprep.subr.mxu0 0.0
          %620 = vmatpush1.msra.mxu0 0.0
          %621 = vmatprep.subr.mxu0 0.0
          %622 = vmatpush1.msra.mxu0 0.0
          %623 = vmatprep.subr.mxu0 0.0
          %624 = vmatpush1.msra.mxu0 0.0
          %625 = vmatprep.subr.mxu0 0.0
          %626 = vmatpush1.msra.mxu0 0.0
          %627 = vmatprep.mubr.f32.mxu0 0.0
          %628 = vmatmul.mubr.f32.gmra.mrb[0].mxu0 %v561
          %v629 = vpop.f32.mrb[0].mxu0
          %v630 = vadd.f32 %v557, %v629
          %v631 = vpop.f32.mrb[0].mxu0
          %632 = vdwg.mxu0
          %633 = vst.msk [vmem:[#allocation2] sm:$0xff] %vm559, %v630
          %v634 = vld [vmem:[%s6] sm:$0x1]
          %v636 = vlaneseq
          %v637 = vshrl.u32 %v636, 7
          %v638 = vsub.s32 0, %v637
          %v639 = vrot.slane %v634, %v638
          %641 = vmatprep.subr.mxu0 0.0
          %642 = vmatpush1.msra.mxu0 %v548
          %643 = vmatprep.subr.mxu0 0.0
          %644 = vmatpush1.msra.mxu0 %v549
          %645 = vmatprep.subr.mxu0 0.0
          %646 = vmatpush1.msra.mxu0 %v550
          %647 = vmatprep.subr.mxu0 0.0
          %648 = vmatpush1.msra.mxu0 %v551
          %649 = vmatprep.subr.mxu0 0.0
          %650 = vmatpush1.msra.mxu0 0.0
          %651 = vmatprep.subr.mxu0 0.0
          %652 = vmatpush1.msra.mxu0 0.0
          %653 = vmatprep.subr.mxu0 0.0
          %654 = vmatpush1.msra.mxu0 0.0
          %655 = vmatprep.subr.mxu0 0.0
          %656 = vmatpush1.msra.mxu0 0.0
          %657 = vmatprep.subr.mxu0 0.0
          %658 = vmatpush1.msra.mxu0 0.0
          %659 = vmatprep.subr.mxu0 0.0
          %660 = vmatpush1.msra.mxu0 0.0
          %661 = vmatprep.subr.mxu0 0.0
          %662 = vmatpush1.msra.mxu0 0.0
          %663 = vmatprep.subr.mxu0 0.0
          %664 = vmatpush1.msra.mxu0 0.0
          %665 = vmatprep.subr.mxu0 0.0
          %666 = vmatpush1.msra.mxu0 0.0
          %667 = vmatprep.subr.mxu0 0.0
          %668 = vmatpush1.msra.mxu0 0.0
          %669 = vmatprep.subr.mxu0 0.0
          %670 = vmatpush1.msra.mxu0 0.0
          %671 = vmatprep.subr.mxu0 0.0
          %672 = vmatpush1.msra.mxu0 0.0
          %673 = vmatprep.subr.mxu0 0.0
          %674 = vmatpush1.msra.mxu0 0.0
          %675 = vmatprep.subr.mxu0 0.0
          %676 = vmatpush1.msra.mxu0 0.0
          %677 = vmatprep.subr.mxu0 0.0
          %678 = vmatpush1.msra.mxu0 0.0
          %679 = vmatprep.subr.mxu0 0.0
          %680 = vmatpush1.msra.mxu0 0.0
          %681 = vmatprep.subr.mxu0 0.0
          %682 = vmatpush1.msra.mxu0 0.0
          %683 = vmatprep.subr.mxu0 0.0
          %684 = vmatpush1.msra.mxu0 0.0
          %685 = vmatprep.subr.mxu0 0.0
          %686 = vmatpush1.msra.mxu0 0.0
          %687 = vmatprep.subr.mxu0 0.0
          %688 = vmatpush1.msra.mxu0 0.0
          %689 = vmatprep.subr.mxu0 0.0
          %690 = vmatpush1.msra.mxu0 0.0
          %691 = vmatprep.subr.mxu0 0.0
          %692 = vmatpush1.msra.mxu0 0.0
          %693 = vmatprep.subr.mxu0 0.0
          %694 = vmatpush1.msra.mxu0 0.0
          %695 = vmatprep.subr.mxu0 0.0
          %696 = vmatpush1.msra.mxu0 0.0
          %697 = vmatprep.subr.mxu0 0.0
          %698 = vmatpush1.msra.mxu0 0.0
          %699 = vmatprep.subr.mxu0 0.0
          %700 = vmatpush1.msra.mxu0 0.0
          %701 = vmatprep.subr.mxu0 0.0
          %702 = vmatpush1.msra.mxu0 0.0
          %703 = vmatprep.subr.mxu0 0.0
          %704 = vmatpush1.msra.mxu0 0.0
          %705 = vmatprep.mubr.f32.mxu0 0.0
          %706 = vmatmul.mubr.f32.gmra.mrb[0].mxu0 %v561
          %v707 = vpop.f32.mrb[0].mxu0
          %v708 = vadd.f32 %v639, %v707
          %v709 = vpop.f32.mrb[0].mxu0
          %710 = vdwg.mxu0
          %711 = vst.msk [vmem:[#allocation3] sm:$0xff] %vm559, %v708
        $region92: #{tpu_custom_call.1} parent=79 // pred_fallthru
          _
        %s712 = smul.u32 %s38, 8
        %s713 = scalar_lea.vmem %s488, %s712 [#allocation5]
        %v714 = vld [vmem:[%s713] sm:$0xff]
        %v715 = vld [vmem:[%s1] sm:$0xff]
        %v716 = vld [vmem:[%s1 + $0x8] sm:$0xff]
        %v717 = vld [vmem:[%s1 + $0x10] sm:$0xff]
        %v718 = vld [vmem:[%s1 + $0x18] sm:$0xff]
        %v719 = vld [vmem:[%s2] sm:$0x1]
        %v721 = vlaneseq
        %v722 = vshrl.u32 %v721, 7
        %v723 = vsub.s32 0, %v722
        %v724 = vrot.slane %v719, %v723
        %vm726 = vcmask 261120
        %v728 = vsel %vm726, %v714, 0
        %730 = vmatprep.subr.mxu0 0.0
        %731 = vmatpush1.msra.mxu0 %v715
        %732 = vmatprep.subr.mxu0 0.0
        %733 = vmatpush1.msra.mxu0 %v716
        %734 = vmatprep.subr.mxu0 0.0
        %735 = vmatpush1.msra.mxu0 %v717
        %736 = vmatprep.subr.mxu0 0.0
        %737 = vmatpush1.msra.mxu0 %v718
        %738 = vmatprep.subr.mxu0 0.0
        %739 = vmatpush1.msra.mxu0 0.0
        %740 = vmatprep.subr.mxu0 0.0
        %741 = vmatpush1.msra.mxu0 0.0
        %742 = vmatprep.subr.mxu0 0.0
        %743 = vmatpush1.msra.mxu0 0.0
        %744 = vmatprep.subr.mxu0 0.0
        %745 = vmatpush1.msra.mxu0 0.0
        %746 = vmatprep.subr.mxu0 0.0
        %747 = vmatpush1.msra.mxu0 0.0
        %748 = vmatprep.subr.mxu0 0.0
        %749 = vmatpush1.msra.mxu0 0.0
        %750 = vmatprep.subr.mxu0 0.0
        %751 = vmatpush1.msra.mxu0 0.0
        %752 = vmatprep.subr.mxu0 0.0
        %753 = vmatpush1.msra.mxu0 0.0
        %754 = vmatprep.subr.mxu0 0.0
        %755 = vmatpush1.msra.mxu0 0.0
        %756 = vmatprep.subr.mxu0 0.0
        %757 = vmatpush1.msra.mxu0 0.0
        %758 = vmatprep.subr.mxu0 0.0
        %759 = vmatpush1.msra.mxu0 0.0
        %760 = vmatprep.subr.mxu0 0.0
        %761 = vmatpush1.msra.mxu0 0.0
        %762 = vmatprep.subr.mxu0 0.0
        %763 = vmatpush1.msra.mxu0 0.0
        %764 = vmatprep.subr.mxu0 0.0
        %765 = vmatpush1.msra.mxu0 0.0
        %766 = vmatprep.subr.mxu0 0.0
        %767 = vmatpush1.msra.mxu0 0.0
        %768 = vmatprep.subr.mxu0 0.0
        %769 = vmatpush1.msra.mxu0 0.0
        %770 = vmatprep.subr.mxu0 0.0
        %771 = vmatpush1.msra.mxu0 0.0
        %772 = vmatprep.subr.mxu0 0.0
        %773 = vmatpush1.msra.mxu0 0.0
        %774 = vmatprep.subr.mxu0 0.0
        %775 = vmatpush1.msra.mxu0 0.0
        %776 = vmatprep.subr.mxu0 0.0
        %777 = vmatpush1.msra.mxu0 0.0
        %778 = vmatprep.subr.mxu0 0.0
        %779 = vmatpush1.msra.mxu0 0.0
        %780 = vmatprep.subr.mxu0 0.0
        %781 = vmatpush1.msra.mxu0 0.0
        %782 = vmatprep.subr.mxu0 0.0
        %783 = vmatpush1.msra.mxu0 0.0
        %784 = vmatprep.subr.mxu0 0.0
        %785 = vmatpush1.msra.mxu0 0.0
        %786 = vmatprep.subr.mxu0 0.0
        %787 = vmatpush1.msra.mxu0 0.0
        %788 = vmatprep.subr.mxu0 0.0
        %789 = vmatpush1.msra.mxu0 0.0
        %790 = vmatprep.subr.mxu0 0.0
        %791 = vmatpush1.msra.mxu0 0.0
        %792 = vmatprep.subr.mxu0 0.0
        %793 = vmatpush1.msra.mxu0 0.0
        %794 = vmatprep.mubr.f32.mxu0 0.0
        %795 = vmatmul.mubr.f32.gmra.mrb[0].mxu0 %v728
        %v796 = vpop.f32.mrb[0].mxu0
        %v797 = vadd.f32 %v724, %v796
        %v798 = vpop.f32.mrb[0].mxu0
        %799 = vdwg.mxu0
        %v800 = vmul.f32 %v797, 0.35355338
        %v801 = vld [vmem:[#allocation2] sm:$0xff]
        %vm802 = vcmask 64512
        %v804 = vsel %vm802, %v800, 0
        %v807 = vsel %vm802, %v801, 0
        %809 = vmatprep.subr.mxu0 0.0
        %810 = vmatpush1.xpose.msra.mxu0 %v807
        %811 = vmatprep.subr.mxu0 0.0
        %812 = vmatpush1.xpose.msra.mxu0 0.0
        %813 = vmatprep.subr.mxu0 0.0
        %814 = vmatpush1.xpose.msra.mxu0 0.0
        %815 = vmatprep.subr.mxu0 0.0
        %816 = vmatpush1.xpose.msra.mxu0 0.0
        %817 = vmatprep.subr.mxu0 0.0
        %818 = vmatpush1.xpose.msra.mxu0 0.0
        %819 = vmatprep.subr.mxu0 0.0
        %820 = vmatpush1.xpose.msra.mxu0 0.0
        %821 = vmatprep.subr.mxu0 0.0
        %822 = vmatpush1.xpose.msra.mxu0 0.0
        %823 = vmatprep.subr.mxu0 0.0
        %824 = vmatpush1.xpose.msra.mxu0 0.0
        %825 = vmatprep.subr.mxu0 0.0
        %826 = vmatpush1.xpose.msra.mxu0 0.0
        %827 = vmatprep.subr.mxu0 0.0
        %828 = vmatpush1.xpose.msra.mxu0 0.0
        %829 = vmatprep.subr.mxu0 0.0
        %830 = vmatpush1.xpose.msra.mxu0 0.0
        %831 = vmatprep.subr.mxu0 0.0
        %832 = vmatpush1.xpose.msra.mxu0 0.0
        %833 = vmatprep.subr.mxu0 0.0
        %834 = vmatpush1.xpose.msra.mxu0 0.0
        %835 = vmatprep.subr.mxu0 0.0
        %836 = vmatpush1.xpose.msra.mxu0 0.0
        %837 = vmatprep.subr.mxu0 0.0
        %838 = vmatpush1.xpose.msra.mxu0 0.0
        %839 = vmatprep.subr.mxu0 0.0
        %840 = vmatpush1.xpose.msra.mxu0 0.0
        %841 = vmatprep.subr.mxu0 0.0
        %842 = vmatpush1.xpose.msra.mxu0 0.0
        %843 = vmatprep.subr.mxu0 0.0
        %844 = vmatpush1.xpose.msra.mxu0 0.0
        %845 = vmatprep.subr.mxu0 0.0
        %846 = vmatpush1.xpose.msra.mxu0 0.0
        %847 = vmatprep.subr.mxu0 0.0
        %848 = vmatpush1.xpose.msra.mxu0 0.0
        %849 = vmatprep.subr.mxu0 0.0
        %850 = vmatpush1.xpose.msra.mxu0 0.0
        %851 = vmatprep.subr.mxu0 0.0
        %852 = vmatpush1.xpose.msra.mxu0 0.0
        %853 = vmatprep.subr.mxu0 0.0
        %854 = vmatpush1.xpose.msra.mxu0 0.0
        %855 = vmatprep.subr.mxu0 0.0
        %856 = vmatpush1.xpose.msra.mxu0 0.0
        %857 = vmatprep.subr.mxu0 0.0
        %858 = vmatpush1.xpose.msra.mxu0 0.0
        %859 = vmatprep.subr.mxu0 0.0
        %860 = vmatpush1.xpose.msra.mxu0 0.0
        %861 = vmatprep.subr.mxu0 0.0
        %862 = vmatpush1.xpose.msra.mxu0 0.0
        %863 = vmatprep.subr.mxu0 0.0
        %864 = vmatpush1.xpose.msra.mxu0 0.0
        %865 = vmatprep.subr.mxu0 0.0
        %866 = vmatpush1.xpose.msra.mxu0 0.0
        %867 = vmatprep.subr.mxu0 0.0
        %868 = vmatpush1.xpose.msra.mxu0 0.0
        %869 = vmatprep.subr.mxu0 0.0
        %870 = vmatpush1.xpose.msra.mxu0 0.0
        %871 = vmatprep.subr.mxu0 0.0
        %872 = vmatpush1.xpose.msra.mxu0 0.0
        %873 = vmatprep.mubr.f32.mxu0 0.0
        %874 = vmatmul.mubr.f32.gmra.mrb[0].mxu0 %v804
        %v875 = vpop.f32.mrb[0].mxu0
        %v876 = vadd.f32 0.0, %v875
        %v877 = vpop.f32.mrb[0].mxu0
        %878 = vdwg.mxu0
        %v879 = vsel %vm802, %v876, -inf
        %880 = vmax.xlane.f32.xlu0 %v879
        %v881 = vpop.xlane.xlu0 %880
        %v882 = vsub.f32 %v876, %v881
        %v883 = vmul.f32 %v882, 1.442695
        %v884 = vpow.pop %v883
        %v885 = vsel %vm802, %v884, 0.0
        %886 = vadd.xlane.f32.xlu0 %v885
        %v887 = vpop.xlane.xlu0 %886
        %v888 = vrcp.pop %v887
        %v889 = vmul.f32 %v884, %v888
        %v890 = vld [vmem:[#allocation3] sm:$0xff]
        %v892 = vsel %vm802, %v889, 0
        %894 = vmatprep.subr.mxu0 0.0
        %895 = vmatpush1.msra.mxu0 %v890
        %896 = vmatprep.subr.mxu0 0.0
        %897 = vmatpush1.msra.mxu0 0.0
        %898 = vmatprep.subr.mxu0 0.0
        %899 = vmatpush1.msra.mxu0 0.0
        %900 = vmatprep.subr.mxu0 0.0
        %901 = vmatpush1.msra.mxu0 0.0
        %902 = vmatprep.subr.mxu0 0.0
        %903 = vmatpush1.msra.mxu0 0.0
        %904 = vmatprep.subr.mxu0 0.0
        %905 = vmatpush1.msra.mxu0 0.0
        %906 = vmatprep.subr.mxu0 0.0
        %907 = vmatpush1.msra.mxu0 0.0
        %908 = vmatprep.subr.mxu0 0.0
        %909 = vmatpush1.msra.mxu0 0.0
        %910 = vmatprep.subr.mxu0 0.0
        %911 = vmatpush1.msra.mxu0 0.0
        %912 = vmatprep.subr.mxu0 0.0
        %913 = vmatpush1.msra.mxu0 0.0
        %914 = vmatprep.subr.mxu0 0.0
        %915 = vmatpush1.msra.mxu0 0.0
        %916 = vmatprep.subr.mxu0 0.0
        %917 = vmatpush1.msra.mxu0 0.0
        %918 = vmatprep.subr.mxu0 0.0
        %919 = vmatpush1.msra.mxu0 0.0
        %920 = vmatprep.subr.mxu0 0.0
        %921 = vmatpush1.msra.mxu0 0.0
        %922 = vmatprep.subr.mxu0 0.0
        %923 = vmatpush1.msra.mxu0 0.0
        %924 = vmatprep.subr.mxu0 0.0
        %925 = vmatpush1.msra.mxu0 0.0
        %926 = vmatprep.subr.mxu0 0.0
        %927 = vmatpush1.msra.mxu0 0.0
        %928 = vmatprep.subr.mxu0 0.0
        %929 = vmatpush1.msra.mxu0 0.0
        %930 = vmatprep.subr.mxu0 0.0
        %931 = vmatpush1.msra.mxu0 0.0
        %932 = vmatprep.subr.mxu0 0.0
        %933 = vmatpush1.msra.mxu0 0.0
        %934 = vmatprep.subr.mxu0 0.0
        %935 = vmatpush1.msra.mxu0 0.0
        %936 = vmatprep.subr.mxu0 0.0
        %937 = vmatpush1.msra.mxu0 0.0
        %938 = vmatprep.subr.mxu0 0.0
        %939 = vmatpush1.msra.mxu0 0.0
        %940 = vmatprep.subr.mxu0 0.0
        %941 = vmatpush1.msra.mxu0 0.0
        %942 = vmatprep.subr.mxu0 0.0
        %943 = vmatpush1.msra.mxu0 0.0
        %944 = vmatprep.subr.mxu0 0.0
        %945 = vmatpush1.msra.mxu0 0.0
        %946 = vmatprep.subr.mxu0 0.0
        %947 = vmatpush1.msra.mxu0 0.0
        %948 = vmatprep.subr.mxu0 0.0
        %949 = vmatpush1.msra.mxu0 0.0
        %950 = vmatprep.subr.mxu0 0.0
        %951 = vmatpush1.msra.mxu0 0.0
        %952 = vmatprep.subr.mxu0 0.0
        %953 = vmatpush1.msra.mxu0 0.0
        %954 = vmatprep.subr.mxu0 0.0
        %955 = vmatpush1.msra.mxu0 0.0
        %956 = vmatprep.subr.mxu0 0.0
        %957 = vmatpush1.msra.mxu0 0.0
        %958 = vmatprep.mubr.f32.mxu0 0.0
        %959 = vmatmul.mubr.f32.gmra.mrb[0].mxu0 %v892
        %v960 = vpop.f32.mrb[0].mxu0
        %v961 = vadd.f32 0.0, %v960
        %v962 = vpop.f32.mrb[0].mxu0
        %963 = vdwg.mxu0
        %964 = vst.msk [vmem:[#allocation4] sm:$0xff] %vm802, %v961
        %v965 = vld [vmem:[#allocation2] sm:$0xff]
        %966 = vrot.lane.b32.xlu0 %v800, 120
        %v967 = vpop.permute.xlu0 %966
        %969 = vrot.lane.b32.xlu0 %v965, 120
        %v970 = vpop.permute.xlu0 %969
        %v971 = vsel %vm802, %v967, 0
        %v973 = vsel %vm802, %v970, 0
        %975 = vmatprep.subr.mxu0 0.0
        %976 = vmatpush1.xpose.msra.mxu0 %v973
        %977 = vmatprep.subr.mxu0 0.0
        %978 = vmatpush1.xpose.msra.mxu0 0.0
        %979 = vmatprep.subr.mxu0 0.0
        %980 = vmatpush1.xpose.msra.mxu0 0.0
        %981 = vmatprep.subr.mxu0 0.0
        %982 = vmatpush1.xpose.msra.mxu0 0.0
        %983 = vmatprep.subr.mxu0 0.0
        %984 = vmatpush1.xpose.msra.mxu0 0.0
        %985 = vmatprep.subr.mxu0 0.0
        %986 = vmatpush1.xpose.msra.mxu0 0.0
        %987 = vmatprep.subr.mxu0 0.0
        %988 = vmatpush1.xpose.msra.mxu0 0.0
        %989 = vmatprep.subr.mxu0 0.0
        %990 = vmatpush1.xpose.msra.mxu0 0.0
        %991 = vmatprep.subr.mxu0 0.0
        %992 = vmatpush1.xpose.msra.mxu0 0.0
        %993 = vmatprep.subr.mxu0 0.0
        %994 = vmatpush1.xpose.msra.mxu0 0.0
        %995 = vmatprep.subr.mxu0 0.0
        %996 = vmatpush1.xpose.msra.mxu0 0.0
        %997 = vmatprep.subr.mxu0 0.0
        %998 = vmatpush1.xpose.msra.mxu0 0.0
        %999 = vmatprep.subr.mxu0 0.0
        %1000 = vmatpush1.xpose.msra.mxu0 0.0
        %1001 = vmatprep.subr.mxu0 0.0
        %1002 = vmatpush1.xpose.msra.mxu0 0.0
        %1003 = vmatprep.subr.mxu0 0.0
        %1004 = vmatpush1.xpose.msra.mxu0 0.0
        %1005 = vmatprep.subr.mxu0 0.0
        %1006 = vmatpush1.xpose.msra.mxu0 0.0
        %1007 = vmatprep.subr.mxu0 0.0
        %1008 = vmatpush1.xpose.msra.mxu0 0.0
        %1009 = vmatprep.subr.mxu0 0.0
        %1010 = vmatpush1.xpose.msra.mxu0 0.0
        %1011 = vmatprep.subr.mxu0 0.0
        %1012 = vmatpush1.xpose.msra.mxu0 0.0
        %1013 = vmatprep.subr.mxu0 0.0
        %1014 = vmatpush1.xpose.msra.mxu0 0.0
        %1015 = vmatprep.subr.mxu0 0.0
        %1016 = vmatpush1.xpose.msra.mxu0 0.0
        %1017 = vmatprep.subr.mxu0 0.0
        %1018 = vmatpush1.xpose.msra.mxu0 0.0
        %1019 = vmatprep.subr.mxu0 0.0
        %1020 = vmatpush1.xpose.msra.mxu0 0.0
        %1021 = vmatprep.subr.mxu0 0.0
        %1022 = vmatpush1.xpose.msra.mxu0 0.0
        %1023 = vmatprep.subr.mxu0 0.0
        %1024 = vmatpush1.xpose.msra.mxu0 0.0
        %1025 = vmatprep.subr.mxu0 0.0
        %1026 = vmatpush1.xpose.msra.mxu0 0.0
        %1027 = vmatprep.subr.mxu0 0.0
        %1028 = vmatpush1.xpose.msra.mxu0 0.0
        %1029 = vmatprep.subr.mxu0 0.0
        %1030 = vmatpush1.xpose.msra.mxu0 0.0
        %1031 = vmatprep.subr.mxu0 0.0
        %1032 = vmatpush1.xpose.msra.mxu0 0.0
        %1033 = vmatprep.subr.mxu0 0.0
        %1034 = vmatpush1.xpose.msra.mxu0 0.0
        %1035 = vmatprep.subr.mxu0 0.0
        %1036 = vmatpush1.xpose.msra.mxu0 0.0
        %1037 = vmatprep.subr.mxu0 0.0
        %1038 = vmatpush1.xpose.msra.mxu0 0.0
        %1039 = vmatprep.mubr.f32.mxu0 0.0
        %1040 = vmatmul.mubr.f32.gmra.mrb[0].mxu0 %v971
        %v1041 = vpop.f32.mrb[0].mxu0
        %v1042 = vadd.f32 0.0, %v1041
        %v1043 = vpop.f32.mrb[0].mxu0
        %1044 = vdwg.mxu0
        %v1045 = vsel %vm802, %v1042, -inf
        %1046 = vmax.xlane.f32.xlu0 %v1045
        %v1047 = vpop.xlane.xlu0 %1046
        %v1048 = vsub.f32 %v1042, %v1047
        %v1049 = vmul.f32 %v1048, 1.442695
        %v1050 = vpow.pop %v1049
        %v1051 = vsel %vm802, %v1050, 0.0
        %1052 = vadd.xlane.f32.xlu0 %v1051
        %v1053 = vpop.xlane.xlu0 %1052
        %v1054 = vrcp.pop %v1053
        %v1055 = vmul.f32 %v1050, %v1054
        %v1056 = vld [vmem:[#allocation3] sm:$0xff]
        %1058 = vrot.lane.b32.xlu0 %v1056, 120
        %v1059 = vpop.permute.xlu0 %1058
        %v1062 = vsel %vm802, %v1055, 0
        %1064 = vmatprep.subr.mxu0 0.0
        %1065 = vmatpush1.msra.mxu0 %v1059
        %1066 = vmatprep.subr.mxu0 0.0
        %1067 = vmatpush1.msra.mxu0 0.0
        %1068 = vmatprep.subr.mxu0 0.0
        %1069 = vmatpush1.msra.mxu0 0.0
        %1070 = vmatprep.subr.mxu0 0.0
        %1071 = vmatpush1.msra.mxu0 0.0
        %1072 = vmatprep.subr.mxu0 0.0
        %1073 = vmatpush1.msra.mxu0 0.0
        %1074 = vmatprep.subr.mxu0 0.0
        %1075 = vmatpush1.msra.mxu0 0.0
        %1076 = vmatprep.subr.mxu0 0.0
        %1077 = vmatpush1.msra.mxu0 0.0
        %1078 = vmatprep.subr.mxu0 0.0
        %1079 = vmatpush1.msra.mxu0 0.0
        %1080 = vmatprep.subr.mxu0 0.0
        %1081 = vmatpush1.msra.mxu0 0.0
        %1082 = vmatprep.subr.mxu0 0.0
        %1083 = vmatpush1.msra.mxu0 0.0
        %1084 = vmatprep.subr.mxu0 0.0
        %1085 = vmatpush1.msra.mxu0 0.0
        %1086 = vmatprep.subr.mxu0 0.0
        %1087 = vmatpush1.msra.mxu0 0.0
        %1088 = vmatprep.subr.mxu0 0.0
        %1089 = vmatpush1.msra.mxu0 0.0
        %1090 = vmatprep.subr.mxu0 0.0
        %1091 = vmatpush1.msra.mxu0 0.0
        %1092 = vmatprep.subr.mxu0 0.0
        %1093 = vmatpush1.msra.mxu0 0.0
        %1094 = vmatprep.subr.mxu0 0.0
        %1095 = vmatpush1.msra.mxu0 0.0
        %1096 = vmatprep.subr.mxu0 0.0
        %1097 = vmatpush1.msra.mxu0 0.0
        %1098 = vmatprep.subr.mxu0 0.0
        %1099 = vmatpush1.msra.mxu0 0.0
        %1100 = vmatprep.subr.mxu0 0.0
        %1101 = vmatpush1.msra.mxu0 0.0
        %1102 = vmatprep.subr.mxu0 0.0
        %1103 = vmatpush1.msra.mxu0 0.0
        %1104 = vmatprep.subr.mxu0 0.0
        %1105 = vmatpush1.msra.mxu0 0.0
        %1106 = vmatprep.subr.mxu0 0.0
        %1107 = vmatpush1.msra.mxu0 0.0
        %1108 = vmatprep.subr.mxu0 0.0
        %1109 = vmatpush1.msra.mxu0 0.0
        %1110 = vmatprep.subr.mxu0 0.0
        %1111 = vmatpush1.msra.mxu0 0.0
        %1112 = vmatprep.subr.mxu0 0.0
        %1113 = vmatpush1.msra.mxu0 0.0
        %1114 = vmatprep.subr.mxu0 0.0
        %1115 = vmatpush1.msra.mxu0 0.0
        %1116 = vmatprep.subr.mxu0 0.0
        %1117 = vmatpush1.msra.mxu0 0.0
        %1118 = vmatprep.subr.mxu0 0.0
        %1119 = vmatpush1.msra.mxu0 0.0
        %1120 = vmatprep.subr.mxu0 0.0
        %1121 = vmatpush1.msra.mxu0 0.0
        %1122 = vmatprep.subr.mxu0 0.0
        %1123 = vmatpush1.msra.mxu0 0.0
        %1124 = vmatprep.subr.mxu0 0.0
        %1125 = vmatpush1.msra.mxu0 0.0
        %1126 = vmatprep.subr.mxu0 0.0
        %1127 = vmatpush1.msra.mxu0 0.0
        %1128 = vmatprep.mubr.f32.mxu0 0.0
        %1129 = vmatmul.mubr.f32.gmra.mrb[0].mxu0 %v1062
        %v1130 = vpop.f32.mrb[0].mxu0
        %v1131 = vadd.f32 0.0, %v1130
        %v1132 = vpop.f32.mrb[0].mxu0
        %1133 = vdwg.mxu0
        %1135 = vrot.lane.b32.xlu0 %v1131, 8
        %v1136 = vpop.permute.xlu0 %1135
        %vm1138 = vcmask 130112
        %1139 = vst.msk [vmem:[#allocation4] sm:$0xff] %vm1138, %v1136
        %v1140 = vld [vmem:[#allocation2] sm:$0xff]
        %1141 = vrot.lane.b32.xlu0 %v800, 112
        %v1142 = vpop.permute.xlu0 %1141
        %1144 = vrot.lane.b32.xlu0 %v1140, 112
        %v1145 = vpop.permute.xlu0 %1144
        %v1146 = vsel %vm802, %v1142, 0
        %v1148 = vsel %vm802, %v1145, 0
        %1150 = vmatprep.subr.mxu0 0.0
        %1151 = vmatpush1.xpose.msra.mxu0 %v1148
        %1152 = vmatprep.subr.mxu0 0.0
        %1153 = vmatpush1.xpose.msra.mxu0 0.0
        %1154 = vmatprep.subr.mxu0 0.0
        %1155 = vmatpush1.xpose.msra.mxu0 0.0
        %1156 = vmatprep.subr.mxu0 0.0
        %1157 = vmatpush1.xpose.msra.mxu0 0.0
        %1158 = vmatprep.subr.mxu0 0.0
        %1159 = vmatpush1.xpose.msra.mxu0 0.0
        %1160 = vmatprep.subr.mxu0 0.0
        %1161 = vmatpush1.xpose.msra.mxu0 0.0
        %1162 = vmatprep.subr.mxu0 0.0
        %1163 = vmatpush1.xpose.msra.mxu0 0.0
        %1164 = vmatprep.subr.mxu0 0.0
        %1165 = vmatpush1.xpose.msra.mxu0 0.0
        %1166 = vmatprep.subr.mxu0 0.0
        %1167 = vmatpush1.xpose.msra.mxu0 0.0
        %1168 = vmatprep.subr.mxu0 0.0
        %1169 = vmatpush1.xpose.msra.mxu0 0.0
        %1170 = vmatprep.subr.mxu0 0.0
        %1171 = vmatpush1.xpose.msra.mxu0 0.0
        %1172 = vmatprep.subr.mxu0 0.0
        %1173 = vmatpush1.xpose.msra.mxu0 0.0
        %1174 = vmatprep.subr.mxu0 0.0
        %1175 = vmatpush1.xpose.msra.mxu0 0.0
        %1176 = vmatprep.subr.mxu0 0.0
        %1177 = vmatpush1.xpose.msra.mxu0 0.0
        %1178 = vmatprep.subr.mxu0 0.0
        %1179 = vmatpush1.xpose.msra.mxu0 0.0
        %1180 = vmatprep.subr.mxu0 0.0
        %1181 = vmatpush1.xpose.msra.mxu0 0.0
        %1182 = vmatprep.subr.mxu0 0.0
        %1183 = vmatpush1.xpose.msra.mxu0 0.0
        %1184 = vmatprep.subr.mxu0 0.0
        %1185 = vmatpush1.xpose.msra.mxu0 0.0
        %1186 = vmatprep.subr.mxu0 0.0
        %1187 = vmatpush1.xpose.msra.mxu0 0.0
        %1188 = vmatprep.subr.mxu0 0.0
        %1189 = vmatpush1.xpose.msra.mxu0 0.0
        %1190 = vmatprep.subr.mxu0 0.0
        %1191 = vmatpush1.xpose.msra.mxu0 0.0
        %1192 = vmatprep.subr.mxu0 0.0
        %1193 = vmatpush1.xpose.msra.mxu0 0.0
        %1194 = vmatprep.subr.mxu0 0.0
        %1195 = vmatpush1.xpose.msra.mxu0 0.0
        %1196 = vmatprep.subr.mxu0 0.0
        %1197 = vmatpush1.xpose.msra.mxu0 0.0
        %1198 = vmatprep.subr.mxu0 0.0
        %1199 = vmatpush1.xpose.msra.mxu0 0.0
        %1200 = vmatprep.subr.mxu0 0.0
        %1201 = vmatpush1.xpose.msra.mxu0 0.0
        %1202 = vmatprep.subr.mxu0 0.0
        %1203 = vmatpush1.xpose.msra.mxu0 0.0
        %1204 = vmatprep.subr.mxu0 0.0
        %1205 = vmatpush1.xpose.msra.mxu0 0.0
        %1206 = vmatprep.subr.mxu0 0.0
        %1207 = vmatpush1.xpose.msra.mxu0 0.0
        %1208 = vmatprep.subr.mxu0 0.0
        %1209 = vmatpush1.xpose.msra.mxu0 0.0
        %1210 = vmatprep.subr.mxu0 0.0
        %1211 = vmatpush1.xpose.msra.mxu0 0.0
        %1212 = vmatprep.subr.mxu0 0.0
        %1213 = vmatpush1.xpose.msra.mxu0 0.0
        %1214 = vmatprep.mubr.f32.mxu0 0.0
        %1215 = vmatmul.mubr.f32.gmra.mrb[0].mxu0 %v1146
        %v1216 = vpop.f32.mrb[0].mxu0
        %v1217 = vadd.f32 0.0, %v1216
        %v1218 = vpop.f32.mrb[0].mxu0
        %1219 = vdwg.mxu0
        %v1220 = vsel %vm802, %v1217, -inf
        %1221 = vmax.xlane.f32.xlu0 %v1220
        %v1222 = vpop.xlane.xlu0 %1221
        %v1223 = vsub.f32 %v1217, %v1222
        %v1224 = vmul.f32 %v1223, 1.442695
        %v1225 = vpow.pop %v1224
        %v1226 = vsel %vm802, %v1225, 0.0
        %1227 = vadd.xlane.f32.xlu0 %v1226
        %v1228 = vpop.xlane.xlu0 %1227
        %v1229 = vrcp.pop %v1228
        %v1230 = vmul.f32 %v1225, %v1229
        %v1231 = vld [vmem:[#allocation3] sm:$0xff]
        %1233 = vrot.lane.b32.xlu0 %v1231, 112
        %v1234 = vpop.permute.xlu0 %1233
        %v1237 = vsel %vm802, %v1230, 0
        %1239 = vmatprep.subr.mxu0 0.0
        %1240 = vmatpush1.msra.mxu0 %v1234
        %1241 = vmatprep.subr.mxu0 0.0
        %1242 = vmatpush1.msra.mxu0 0.0
        %1243 = vmatprep.subr.mxu0 0.0
        %1244 = vmatpush1.msra.mxu0 0.0
        %1245 = vmatprep.subr.mxu0 0.0
        %1246 = vmatpush1.msra.mxu0 0.0
        %1247 = vmatprep.subr.mxu0 0.0
        %1248 = vmatpush1.msra.mxu0 0.0
        %1249 = vmatprep.subr.mxu0 0.0
        %1250 = vmatpush1.msra.mxu0 0.0
        %1251 = vmatprep.subr.mxu0 0.0
        %1252 = vmatpush1.msra.mxu0 0.0
        %1253 = vmatprep.subr.mxu0 0.0
        %1254 = vmatpush1.msra.mxu0 0.0
        %1255 = vmatprep.subr.mxu0 0.0
        %1256 = vmatpush1.msra.mxu0 0.0
        %1257 = vmatprep.subr.mxu0 0.0
        %1258 = vmatpush1.msra.mxu0 0.0
        %1259 = vmatprep.subr.mxu0 0.0
        %1260 = vmatpush1.msra.mxu0 0.0
        %1261 = vmatprep.subr.mxu0 0.0
        %1262 = vmatpush1.msra.mxu0 0.0
        %1263 = vmatprep.subr.mxu0 0.0
        %1264 = vmatpush1.msra.mxu0 0.0
        %1265 = vmatprep.subr.mxu0 0.0
        %1266 = vmatpush1.msra.mxu0 0.0
        %1267 = vmatprep.subr.mxu0 0.0
        %1268 = vmatpush1.msra.mxu0 0.0
        %1269 = vmatprep.subr.mxu0 0.0
        %1270 = vmatpush1.msra.mxu0 0.0
        %1271 = vmatprep.subr.mxu0 0.0
        %1272 = vmatpush1.msra.mxu0 0.0
        %1273 = vmatprep.subr.mxu0 0.0
        %1274 = vmatpush1.msra.mxu0 0.0
        %1275 = vmatprep.subr.mxu0 0.0
        %1276 = vmatpush1.msra.mxu0 0.0
        %1277 = vmatprep.subr.mxu0 0.0
        %1278 = vmatpush1.msra.mxu0 0.0
        %1279 = vmatprep.subr.mxu0 0.0
        %1280 = vmatpush1.msra.mxu0 0.0
        %1281 = vmatprep.subr.mxu0 0.0
        %1282 = vmatpush1.msra.mxu0 0.0
        %1283 = vmatprep.subr.mxu0 0.0
        %1284 = vmatpush1.msra.mxu0 0.0
        %1285 = vmatprep.subr.mxu0 0.0
        %1286 = vmatpush1.msra.mxu0 0.0
        %1287 = vmatprep.subr.mxu0 0.0
        %1288 = vmatpush1.msra.mxu0 0.0
        %1289 = vmatprep.subr.mxu0 0.0
        %1290 = vmatpush1.msra.mxu0 0.0
        %1291 = vmatprep.subr.mxu0 0.0
        %1292 = vmatpush1.msra.mxu0 0.0
        %1293 = vmatprep.subr.mxu0 0.0
        %1294 = vmatpush1.msra.mxu0 0.0
        %1295 = vmatprep.subr.mxu0 0.0
        %1296 = vmatpush1.msra.mxu0 0.0
        %1297 = vmatprep.subr.mxu0 0.0
        %1298 = vmatpush1.msra.mxu0 0.0
        %1299 = vmatprep.subr.mxu0 0.0
        %1300 = vmatpush1.msra.mxu0 0.0
        %1301 = vmatprep.subr.mxu0 0.0
        %1302 = vmatpush1.msra.mxu0 0.0
        %1303 = vmatprep.mubr.f32.mxu0 0.0
        %1304 = vmatmul.mubr.f32.gmra.mrb[0].mxu0 %v1237
        %v1305 = vpop.f32.mrb[0].mxu0
        %v1306 = vadd.f32 0.0, %v1305
        %v1307 = vpop.f32.mrb[0].mxu0
        %1308 = vdwg.mxu0
        %1310 = vrot.lane.b32.xlu0 %v1306, 16
        %v1311 = vpop.permute.xlu0 %1310
        %vm1313 = vcmask 195712
        %1314 = vst.msk [vmem:[#allocation4] sm:$0xff] %vm1313, %v1311
        %v1315 = vld [vmem:[#allocation2] sm:$0xff]
        %1316 = vrot.lane.b32.xlu0 %v800, 104
        %v1317 = vpop.permute.xlu0 %1316
        %1319 = vrot.lane.b32.xlu0 %v1315, 104
        %v1320 = vpop.permute.xlu0 %1319
        %v1321 = vsel %vm802, %v1317, 0
        %v1323 = vsel %vm802, %v1320, 0
        %1325 = vmatprep.subr.mxu0 0.0
        %1326 = vmatpush1.xpose.msra.mxu0 %v1323
        %1327 = vmatprep.subr.mxu0 0.0
        %1328 = vmatpush1.xpose.msra.mxu0 0.0
        %1329 = vmatprep.subr.mxu0 0.0
        %1330 = vmatpush1.xpose.msra.mxu0 0.0
        %1331 = vmatprep.subr.mxu0 0.0
        %1332 = vmatpush1.xpose.msra.mxu0 0.0
        %1333 = vmatprep.subr.mxu0 0.0
        %1334 = vmatpush1.xpose.msra.mxu0 0.0
        %1335 = vmatprep.subr.mxu0 0.0
        %1336 = vmatpush1.xpose.msra.mxu0 0.0
        %1337 = vmatprep.subr.mxu0 0.0
        %1338 = vmatpush1.xpose.msra.mxu0 0.0
        %1339 = vmatprep.subr.mxu0 0.0
        %1340 = vmatpush1.xpose.msra.mxu0 0.0
        %1341 = vmatprep.subr.mxu0 0.0
        %1342 = vmatpush1.xpose.msra.mxu0 0.0
        %1343 = vmatprep.subr.mxu0 0.0
        %1344 = vmatpush1.xpose.msra.mxu0 0.0
        %1345 = vmatprep.subr.mxu0 0.0
        %1346 = vmatpush1.xpose.msra.mxu0 0.0
        %1347 = vmatprep.subr.mxu0 0.0
        %1348 = vmatpush1.xpose.msra.mxu0 0.0
        %1349 = vmatprep.subr.mxu0 0.0
        %1350 = vmatpush1.xpose.msra.mxu0 0.0
        %1351 = vmatprep.subr.mxu0 0.0
        %1352 = vmatpush1.xpose.msra.mxu0 0.0
        %1353 = vmatprep.subr.mxu0 0.0
        %1354 = vmatpush1.xpose.msra.mxu0 0.0
        %1355 = vmatprep.subr.mxu0 0.0
        %1356 = vmatpush1.xpose.msra.mxu0 0.0
        %1357 = vmatprep.subr.mxu0 0.0
        %1358 = vmatpush1.xpose.msra.mxu0 0.0
        %1359 = vmatprep.subr.mxu0 0.0
        %1360 = vmatpush1.xpose.msra.mxu0 0.0
        %1361 = vmatprep.subr.mxu0 0.0
        %1362 = vmatpush1.xpose.msra.mxu0 0.0
        %1363 = vmatprep.subr.mxu0 0.0
        %1364 = vmatpush1.xpose.msra.mxu0 0.0
        %1365 = vmatprep.subr.mxu0 0.0
        %1366 = vmatpush1.xpose.msra.mxu0 0.0
        %1367 = vmatprep.subr.mxu0 0.0
        %1368 = vmatpush1.xpose.msra.mxu0 0.0
        %1369 = vmatprep.subr.mxu0 0.0
        %1370 = vmatpush1.xpose.msra.mxu0 0.0
        %1371 = vmatprep.subr.mxu0 0.0
        %1372 = vmatpush1.xpose.msra.mxu0 0.0
        %1373 = vmatprep.subr.mxu0 0.0
        %1374 = vmatpush1.xpose.msra.mxu0 0.0
        %1375 = vmatprep.subr.mxu0 0.0
        %1376 = vmatpush1.xpose.msra.mxu0 0.0
        %1377 = vmatprep.subr.mxu0 0.0
        %1378 = vmatpush1.xpose.msra.mxu0 0.0
        %1379 = vmatprep.subr.mxu0 0.0
        %1380 = vmatpush1.xpose.msra.mxu0 0.0
        %1381 = vmatprep.subr.mxu0 0.0
        %1382 = vmatpush1.xpose.msra.mxu0 0.0
        %1383 = vmatprep.subr.mxu0 0.0
        %1384 = vmatpush1.xpose.msra.mxu0 0.0
        %1385 = vmatprep.subr.mxu0 0.0
        %1386 = vmatpush1.xpose.msra.mxu0 0.0
        %1387 = vmatprep.subr.mxu0 0.0
        %1388 = vmatpush1.xpose.msra.mxu0 0.0
        %1389 = vmatprep.mubr.f32.mxu0 0.0
        %1390 = vmatmul.mubr.f32.gmra.mrb[0].mxu0 %v1321
        %v1391 = vpop.f32.mrb[0].mxu0
        %v1392 = vadd.f32 0.0, %v1391
        %v1393 = vpop.f32.mrb[0].mxu0
        %1394 = vdwg.mxu0
        %v1395 = vsel %vm802, %v1392, -inf
        %1396 = vmax.xlane.f32.xlu0 %v1395
        %v1397 = vpop.xlane.xlu0 %1396
        %v1398 = vsub.f32 %v1392, %v1397
        %v1399 = vmul.f32 %v1398, 1.442695
        %v1400 = vpow.pop %v1399
        %v1401 = vsel %vm802, %v1400, 0.0
        %1402 = vadd.xlane.f32.xlu0 %v1401
        %v1403 = vpop.xlane.xlu0 %1402
        %v1404 = vrcp.pop %v1403
        %v1405 = vmul.f32 %v1400, %v1404
        %v1406 = vld [vmem:[#allocation3] sm:$0xff]
        %1408 = vrot.lane.b32.xlu0 %v1406, 104
        %v1409 = vpop.permute.xlu0 %1408
        %v1412 = vsel %vm802, %v1405, 0
        %1414 = vmatprep.subr.mxu0 0.0
        %1415 = vmatpush1.msra.mxu0 %v1409
        %1416 = vmatprep.subr.mxu0 0.0
        %1417 = vmatpush1.msra.mxu0 0.0
        %1418 = vmatprep.subr.mxu0 0.0
        %1419 = vmatpush1.msra.mxu0 0.0
        %1420 = vmatprep.subr.mxu0 0.0
        %1421 = vmatpush1.msra.mxu0 0.0
        %1422 = vmatprep.subr.mxu0 0.0
        %1423 = vmatpush1.msra.mxu0 0.0
        %1424 = vmatprep.subr.mxu0 0.0
        %1425 = vmatpush1.msra.mxu0 0.0
        %1426 = vmatprep.subr.mxu0 0.0
        %1427 = vmatpush1.msra.mxu0 0.0
        %1428 = vmatprep.subr.mxu0 0.0
        %1429 = vmatpush1.msra.mxu0 0.0
        %1430 = vmatprep.subr.mxu0 0.0
        %1431 = vmatpush1.msra.mxu0 0.0
        %1432 = vmatprep.subr.mxu0 0.0
        %1433 = vmatpush1.msra.mxu0 0.0
        %1434 = vmatprep.subr.mxu0 0.0
        %1435 = vmatpush1.msra.mxu0 0.0
        %1436 = vmatprep.subr.mxu0 0.0
        %1437 = vmatpush1.msra.mxu0 0.0
        %1438 = vmatprep.subr.mxu0 0.0
        %1439 = vmatpush1.msra.mxu0 0.0
        %1440 = vmatprep.subr.mxu0 0.0
        %1441 = vmatpush1.msra.mxu0 0.0
        %1442 = vmatprep.subr.mxu0 0.0
        %1443 = vmatpush1.msra.mxu0 0.0
        %1444 = vmatprep.subr.mxu0 0.0
        %1445 = vmatpush1.msra.mxu0 0.0
        %1446 = vmatprep.subr.mxu0 0.0
        %1447 = vmatpush1.msra.mxu0 0.0
        %1448 = vmatprep.subr.mxu0 0.0
        %1449 = vmatpush1.msra.mxu0 0.0
        %1450 = vmatprep.subr.mxu0 0.0
        %1451 = vmatpush1.msra.mxu0 0.0
        %1452 = vmatprep.subr.mxu0 0.0
        %1453 = vmatpush1.msra.mxu0 0.0
        %1454 = vmatprep.subr.mxu0 0.0
        %1455 = vmatpush1.msra.mxu0 0.0
        %1456 = vmatprep.subr.mxu0 0.0
        %1457 = vmatpush1.msra.mxu0 0.0
        %1458 = vmatprep.subr.mxu0 0.0
        %1459 = vmatpush1.msra.mxu0 0.0
        %1460 = vmatprep.subr.mxu0 0.0
        %1461 = vmatpush1.msra.mxu0 0.0
        %1462 = vmatprep.subr.mxu0 0.0
        %1463 = vmatpush1.msra.mxu0 0.0
        %1464 = vmatprep.subr.mxu0 0.0
        %1465 = vmatpush1.msra.mxu0 0.0
        %1466 = vmatprep.subr.mxu0 0.0
        %1467 = vmatpush1.msra.mxu0 0.0
        %1468 = vmatprep.subr.mxu0 0.0
        %1469 = vmatpush1.msra.mxu0 0.0
        %1470 = vmatprep.subr.mxu0 0.0
        %1471 = vmatpush1.msra.mxu0 0.0
        %1472 = vmatprep.subr.mxu0 0.0
        %1473 = vmatpush1.msra.mxu0 0.0
        %1474 = vmatprep.subr.mxu0 0.0
        %1475 = vmatpush1.msra.mxu0 0.0
        %1476 = vmatprep.subr.mxu0 0.0
        %1477 = vmatpush1.msra.mxu0 0.0
        %1478 = vmatprep.mubr.f32.mxu0 0.0
        %1479 = vmatmul.mubr.f32.gmra.mrb[0].mxu0 %v1412
        %v1480 = vpop.f32.mrb[0].mxu0
        %v1481 = vadd.f32 0.0, %v1480
        %v1482 = vpop.f32.mrb[0].mxu0
        %1483 = vdwg.mxu0
        %1485 = vrot.lane.b32.xlu0 %v1481, 24
        %v1486 = vpop.permute.xlu0 %1485
        %vm1488 = vcmask 261312
        %1489 = vst.msk [vmem:[#allocation4] sm:$0xff] %vm1488, %v1486
        %v1490 = vld [vmem:[#allocation4] sm:$0xff]
        %v1491 = vadd.f32 %v714, %v1490
        %v1492 = vsel %vm726, %v1491, 0.0
        %1493 = vadd.xlane.f32.xlu0 %v1492
        %v1494 = vpop.xlane.xlu0 %1493
        %v1495 = vrcp.pop 32.0
        %v1496 = vmul.f32 %v1494, %v1495
        %v1497 = vsub.f32 %v1491, %v1496
        %v1498 = vmul.f32 %v1497, %v1497
        %v1499 = vsel %vm726, %v1498, 0.0
        %1500 = vadd.xlane.f32.xlu0 %v1499
        %v1501 = vpop.xlane.xlu0 %1500
        %v1502 = vmul.f32 %v1501, %v1495
        %v1503 = vadd.f32 %v1502, 1e-05
        %v1504 = vrsqrt.pop %v1503
        %v1505 = vmul.f32 %v1497, %v1504
        %v1506 = vld [vmem:[%s7] sm:$0x1]
        %v1508 = vlaneseq
        %v1509 = vshrl.u32 %v1508, 7
        %v1510 = vsub.s32 0, %v1509
        %v1511 = vrot.slane %v1506, %v1510
        %v1513 = vmul.f32 %v1505, %v1511
        %v1514 = vld [vmem:[%s8] sm:$0x1]
        %v1516 = vlaneseq
        %v1517 = vshrl.u32 %v1516, 7
        %v1518 = vsub.s32 0, %v1517
        %v1519 = vrot.slane %v1514, %v1518
        %v1521 = vadd.f32 %v1513, %v1519
        %v1522 = vld [vmem:[#allocation8] sm:$0xff]
        %v1523 = vld [vmem:[#allocation8 + $0x8] sm:$0xff]
        %v1524 = vld [vmem:[#allocation8 + $0x10] sm:$0xff]
        %v1525 = vld [vmem:[#allocation8 + $0x18] sm:$0xff]
        %v1526 = vld [vmem:[%s10] sm:$0x1]
        %v1528 = vlaneseq
        %v1529 = vshrl.u32 %v1528, 7
        %v1530 = vsub.s32 0, %v1529
        %v1531 = vrot.slane %v1526, %v1530
        %v1534 = vsel %vm726, %v1521, 0
        %1536 = vmatprep.subr.mxu0 0.0
        %1537 = vmatpush1.msra.mxu0 %v1522
        %1538 = vmatprep.subr.mxu0 0.0
        %1539 = vmatpush1.msra.mxu0 %v1523
        %1540 = vmatprep.subr.mxu0 0.0
        %1541 = vmatpush1.msra.mxu0 %v1524
        %1542 = vmatprep.subr.mxu0 0.0
        %1543 = vmatpush1.msra.mxu0 %v1525
        %1544 = vmatprep.subr.mxu0 0.0
        %1545 = vmatpush1.msra.mxu0 0.0
        %1546 = vmatprep.subr.mxu0 0.0
        %1547 = vmatpush1.msra.mxu0 0.0
        %1548 = vmatprep.subr.mxu0 0.0
        %1549 = vmatpush1.msra.mxu0 0.0
        %1550 = vmatprep.subr.mxu0 0.0
        %1551 = vmatpush1.msra.mxu0 0.0
        %1552 = vmatprep.subr.mxu0 0.0
        %1553 = vmatpush1.msra.mxu0 0.0
        %1554 = vmatprep.subr.mxu0 0.0
        %1555 = vmatpush1.msra.mxu0 0.0
        %1556 = vmatprep.subr.mxu0 0.0
        %1557 = vmatpush1.msra.mxu0 0.0
        %1558 = vmatprep.subr.mxu0 0.0
        %1559 = vmatpush1.msra.mxu0 0.0
        %1560 = vmatprep.subr.mxu0 0.0
        %1561 = vmatpush1.msra.mxu0 0.0
        %1562 = vmatprep.subr.mxu0 0.0
        %1563 = vmatpush1.msra.mxu0 0.0
        %1564 = vmatprep.subr.mxu0 0.0
        %1565 = vmatpush1.msra.mxu0 0.0
        %1566 = vmatprep.subr.mxu0 0.0
        %1567 = vmatpush1.msra.mxu0 0.0
        %1568 = vmatprep.subr.mxu0 0.0
        %1569 = vmatpush1.msra.mxu0 0.0
        %1570 = vmatprep.subr.mxu0 0.0
        %1571 = vmatpush1.msra.mxu0 0.0
        %1572 = vmatprep.subr.mxu0 0.0
        %1573 = vmatpush1.msra.mxu0 0.0
        %1574 = vmatprep.subr.mxu0 0.0
        %1575 = vmatpush1.msra.mxu0 0.0
        %1576 = vmatprep.subr.mxu0 0.0
        %1577 = vmatpush1.msra.mxu0 0.0
        %1578 = vmatprep.subr.mxu0 0.0
        %1579 = vmatpush1.msra.mxu0 0.0
        %1580 = vmatprep.subr.mxu0 0.0
        %1581 = vmatpush1.msra.mxu0 0.0
        %1582 = vmatprep.subr.mxu0 0.0
        %1583 = vmatpush1.msra.mxu0 0.0
        %1584 = vmatprep.subr.mxu0 0.0
        %1585 = vmatpush1.msra.mxu0 0.0
        %1586 = vmatprep.subr.mxu0 0.0
        %1587 = vmatpush1.msra.mxu0 0.0
        %1588 = vmatprep.subr.mxu0 0.0
        %1589 = vmatpush1.msra.mxu0 0.0
        %1590 = vmatprep.subr.mxu0 0.0
        %1591 = vmatpush1.msra.mxu0 0.0
        %1592 = vmatprep.subr.mxu0 0.0
        %1593 = vmatpush1.msra.mxu0 0.0
        %1594 = vmatprep.subr.mxu0 0.0
        %1595 = vmatpush1.msra.mxu0 0.0
        %1596 = vmatprep.subr.mxu0 0.0
        %1597 = vmatpush1.msra.mxu0 0.0
        %1598 = vmatprep.subr.mxu0 0.0
        %1599 = vmatpush1.msra.mxu0 0.0
        %1600 = vmatprep.mubr.f32.mxu0 0.0
        %1601 = vmatmul.mubr.f32.gmra.mrb[0].mxu0 %v1534
        %v1602 = vpop.f32.mrb[0].mxu0
        %v1603 = vadd.f32 %v1531, %v1602
        %v1604 = vpop.f32.mrb[0].mxu0
        %1605 = vdwg.mxu0
        %v1606 = vmax.f32 %v1603, 0.0
        %v1607 = vld [vmem:[%s11] sm:$0xff]
        %v1608 = vld [vmem:[%s11 + $0x8] sm:$0xff]
        %v1609 = vld [vmem:[%s11 + $0x10] sm:$0xff]
        %v1610 = vld [vmem:[%s11 + $0x18] sm:$0xff]
        %v1611 = vld [vmem:[%s11 + $0x20] sm:$0xff]
        %v1612 = vld [vmem:[%s11 + $0x28] sm:$0xff]
        %v1613 = vld [vmem:[%s11 + $0x30] sm:$0xff]
        %v1614 = vld [vmem:[%s11 + $0x38] sm:$0xff]
        %v1615 = vld [vmem:[%s12] sm:$0x1]
        %v1617 = vlaneseq
        %v1618 = vshrl.u32 %v1617, 7
        %v1619 = vsub.s32 0, %v1618
        %v1620 = vrot.slane %v1615, %v1619
        %vm1622 = vcmask 523264
        %v1624 = vsel %vm1622, %v1606, 0
        %1626 = vmatprep.subr.mxu0 0.0
        %1627 = vmatpush1.msra.mxu0 %v1607
        %1628 = vmatprep.subr.mxu0 0.0
        %1629 = vmatpush1.msra.mxu0 %v1608
        %1630 = vmatprep.subr.mxu0 0.0
        %1631 = vmatpush1.msra.mxu0 %v1609
        %1632 = vmatprep.subr.mxu0 0.0
        %1633 = vmatpush1.msra.mxu0 %v1610
        %1634 = vmatprep.subr.mxu0 0.0
        %1635 = vmatpush1.msra.mxu0 %v1611
        %1636 = vmatprep.subr.mxu0 0.0
        %1637 = vmatpush1.msra.mxu0 %v1612
        %1638 = vmatprep.subr.mxu0 0.0
        %1639 = vmatpush1.msra.mxu0 %v1613
        %1640 = vmatprep.subr.mxu0 0.0
        %1641 = vmatpush1.msra.mxu0 %v1614
        %1642 = vmatprep.subr.mxu0 0.0
        %1643 = vmatpush1.msra.mxu0 0.0
        %1644 = vmatprep.subr.mxu0 0.0
        %1645 = vmatpush1.msra.mxu0 0.0
        %1646 = vmatprep.subr.mxu0 0.0
        %1647 = vmatpush1.msra.mxu0 0.0
        %1648 = vmatprep.subr.mxu0 0.0
        %1649 = vmatpush1.msra.mxu0 0.0
        %1650 = vmatprep.subr.mxu0 0.0
        %1651 = vmatpush1.msra.mxu0 0.0
        %1652 = vmatprep.subr.mxu0 0.0
        %1653 = vmatpush1.msra.mxu0 0.0
        %1654 = vmatprep.subr.mxu0 0.0
        %1655 = vmatpush1.msra.mxu0 0.0
        %1656 = vmatprep.subr.mxu0 0.0
        %1657 = vmatpush1.msra.mxu0 0.0
        %1658 = vmatprep.subr.mxu0 0.0
        %1659 = vmatpush1.msra.mxu0 0.0
        %1660 = vmatprep.subr.mxu0 0.0
        %1661 = vmatpush1.msra.mxu0 0.0
        %1662 = vmatprep.subr.mxu0 0.0
        %1663 = vmatpush1.msra.mxu0 0.0
        %1664 = vmatprep.subr.mxu0 0.0
        %1665 = vmatpush1.msra.mxu0 0.0
        %1666 = vmatprep.subr.mxu0 0.0
        %1667 = vmatpush1.msra.mxu0 0.0
        %1668 = vmatprep.subr.mxu0 0.0
        %1669 = vmatpush1.msra.mxu0 0.0
        %1670 = vmatprep.subr.mxu0 0.0
        %1671 = vmatpush1.msra.mxu0 0.0
        %1672 = vmatprep.subr.mxu0 0.0
        %1673 = vmatpush1.msra.mxu0 0.0
        %1674 = vmatprep.subr.mxu0 0.0
        %1675 = vmatpush1.msra.mxu0 0.0
        %1676 = vmatprep.subr.mxu0 0.0
        %1677 = vmatpush1.msra.mxu0 0.0
        %1678 = vmatprep.subr.mxu0 0.0
        %1679 = vmatpush1.msra.mxu0 0.0
        %1680 = vmatprep.subr.mxu0 0.0
        %1681 = vmatpush1.msra.mxu0 0.0
        %1682 = vmatprep.subr.mxu0 0.0
        %1683 = vmatpush1.msra.mxu0 0.0
        %1684 = vmatprep.subr.mxu0 0.0
        %1685 = vmatpush1.msra.mxu0 0.0
        %1686 = vmatprep.subr.mxu0 0.0
        %1687 = vmatpush1.msra.mxu0 0.0
        %1688 = vmatprep.subr.mxu0 0.0
        %1689 = vmatpush1.msra.mxu0 0.0
        %1690 = vmatprep.mubr.f32.mxu0 0.0
        %1691 = vmatmul.mubr.f32.gmra.mrb[0].mxu0 %v1624
        %v1692 = vpop.f32.mrb[0].mxu0
        %v1693 = vadd.f32 %v1620, %v1692
        %v1694 = vpop.f32.mrb[0].mxu0
        %1695 = vdwg.mxu0
        %v1696 = vadd.f32 %v1521, %v1693
        %v1697 = vsel %vm726, %v1696, 0.0
        %1698 = vadd.xlane.f32.xlu0 %v1697
        %v1699 = vpop.xlane.xlu0 %1698
        %v1700 = vmul.f32 %v1699, %v1495
        %v1701 = vsub.f32 %v1696, %v1700
        %v1702 = vmul.f32 %v1701, %v1701
        %v1703 = vsel %vm726, %v1702, 0.0
        %1704 = vadd.xlane.f32.xlu0 %v1703
        %v1705 = vpop.xlane.xlu0 %1704
        %v1706 = vmul.f32 %v1705, %v1495
        %v1707 = vadd.f32 %v1706, 1e-06
        %v1708 = vrsqrt.pop %v1707
        %v1709 = vmul.f32 %v1701, %v1708
        %v1710 = vld [vmem:[%s13] sm:$0x1]
        %v1712 = vlaneseq
        %v1713 = vshrl.u32 %v1712, 7
        %v1714 = vsub.s32 0, %v1713
        %v1715 = vrot.slane %v1710, %v1714
        %v1717 = vmul.f32 %v1709, %v1715
        %v1718 = vld [vmem:[%s14] sm:$0x1]
        %v1720 = vlaneseq
        %v1721 = vshrl.u32 %v1720, 7
        %v1722 = vsub.s32 0, %v1721
        %v1723 = vrot.slane %v1718, %v1722
        %v1725 = vadd.f32 %v1717, %v1723
        %1726 = vst.msk [vmem:[%s538] sm:$0xff] %vm726, %v1725
        %s1727 = sand.u32 %s375, 1
        %s1728 = scalar_lea.sflag [#allocation7], %s1727
        %s1729 = sand.u32 %s375, 1
        %s1730 = smul.addr %s1729, 8
        %s1731 = scalar_lea.vmem [#allocation10], %s1730
        // Predicated region
        $region93: #{tpu_custom_call.1} parent=79 // pred_check
          %p1732 = pneg %p385
        $region94: #{tpu_custom_call.1} parent=79 // pred_check_branch
          %1734 = sbr.rel (%p1732) target = $region96
        $region95: #{tpu_custom_call.1} parent=79 // pred_region
          %s1736 = ssub.s32 128, 128
          %1737 = vsyncadd %s1728, %s1736
          %s1738 = sadd.s32 %s38, %s37
          %s1739 = smul.addr %s1738, 128
          %s1740 = scalar_lea.hbm %s15, %s1739
          %s1742 = sshll.u32 %s1731, 4
          %s1743 = int_to_ptr.vmem [resolvable:$true] %s1742
          %1745 = dma.vmem_to_hbm [thread:$0]  %s1743, 128, %s1740, %s1728
        $region96: #{tpu_custom_call.1} parent=79 // pred_fallthru
          _
      $region80: #{tpu_custom_call.1} parent=5 // pred_fallthru
        _
      %p1746 = scmp.le.s32.totalorder 2, %s28
      // Predicated region
      $region97: #{tpu_custom_call.1} parent=5 // pred_check
        %p1747 = pneg %p1746
      $region98: #{tpu_custom_call.1} parent=5 // pred_check_branch
        %1749 = sbr.rel (%p1747) target = $region100
      $region99: #{tpu_custom_call.1} parent=5 // pred_region
        %s1750 = ssub.s32 %s28, 2
        // Predicated region
        $region101: #{tpu_custom_call.1} parent=99 // pred_check
          %p1751 = pneg %p391
        $region102: #{tpu_custom_call.1} parent=99 // pred_check_branch
          %1753 = sbr.rel (%p1751) target = $region104
        $region103: #{tpu_custom_call.1} parent=99 // pred_region
          %s1754 = sand.u32 %s376, 1
          %s1755 = scalar_lea.sflag [#allocation7], %s1754
          %s1756 = sand.u32 %s376, 1
          %s1757 = smul.addr %s1756, 8
          %s1758 = scalar_lea.vmem [#allocation10], %s1757
          %1759 = dma.done %s1755, 128
        $region104: #{tpu_custom_call.1} parent=99 // pred_fallthru
          _
      $region100: #{tpu_custom_call.1} parent=5 // pred_fallthru
        _
    $region6: #{tpu_custom_call.1} parent=1 // loop_footer
      %s32 = sadd.s32 1, %s28
    $region7: #{tpu_custom_call.1} parent=1 // loop_footer_branch
      %27 = sbr.rel target = $region3
    $region8: #{tpu_custom_call.1} parent=1 // loop_exit
      _
    %1760 = vsyncpa [#allocation6], 1
    %s1761 = scalar_lea.sflag [#allocation6], 1
    %1762 = vsyncpa %s1761, 1
    %1763 = vsyncpa [#allocation9], 1
    %1764 = vsyncpa [#allocation7], 1
    %s1765 = scalar_lea.sflag [#allocation7], 1
    %1766 = vsyncpa %s1765, 1

</llo_original>
